<compile_context>
chip_gen: v7x
topology: tpu7x:2x2x1
jax: 0.10.0
libtpu: 0.0.40
codegen_flags: <defaults>
</compile_context>

<pallas_src>
import functools

import jax
import jax.numpy as jnp
from jax.experimental import pallas as pl
from jax.experimental.pallas import tpu as pltpu


def _round_up(n, m):
    return ((n + m - 1) // m) * m


# --------------------------------------------------------------------------
# Kernel A: y = act(LayerNorm(x) @ W + b)
# --------------------------------------------------------------------------
def _ln_linear_kernel(x_ref, g_ref, be_ref, w_ref, b_ref, o_ref, *, eps,
                      activation):
    x = x_ref[...].astype(jnp.float32)                       # (tm, K)
    mean = jnp.mean(x, axis=-1, keepdims=True)
    xc = x - mean
    var = jnp.mean(xc * xc, axis=-1, keepdims=True)
    inv = jax.lax.rsqrt(var + eps)
    xn = xc * inv * g_ref[...] + be_ref[...]                 # f32 (tm, K)
    y = jnp.dot(xn.astype(jnp.bfloat16), w_ref[...],         # bf16 MXU
                preferred_element_type=jnp.float32)          # (tm, tn) f32
    y = y + b_ref[...]
    if activation == "gelu":
        # TODO(synk): PyTorch nn.GELU default is exact erf-GELU; tanh
        # approximation used here (erf lowering on Mosaic not guaranteed).
        c = jnp.float32(0.7978845608028654)                  # sqrt(2/pi)
        y = 0.5 * y * (1.0 + jnp.tanh(c * (y + 0.044715 * y * y * y)))
    o_ref[...] = y.astype(o_ref.dtype)


def ln_linear(x, gamma, beta, w, b, *, activation=None,
              out_dtype=jnp.bfloat16, eps=1e-6):
    """x: (M, K) f32, w: (K, N) -> (M, N) out_dtype."""
    M, K = x.shape
    N = w.shape[1]
    tm = 256 if M >= 256 else _round_up(M, 8)
    tn = 512 if N >= 512 else N
    M_pad = _round_up(M, tm)
    N_pad = _round_up(N, tn)
    if M_pad != M:
        x = jnp.pad(x, ((0, M_pad - M), (0, 0)))
    if N_pad != N:
        w = jnp.pad(w, ((0, 0), (0, N_pad - N)))
        b = jnp.pad(b, ((0, N_pad - N),))
    w = w.astype(jnp.bfloat16)

    flops = 2 * M_pad * K * N_pad + 10 * M_pad * K
    transcend = M_pad * N_pad if activation == "gelu" else 0
    bytes_acc = 4 * M_pad * K + 2 * K * N_pad + 2 * M_pad * N_pad

    y = pl.pallas_call(
        functools.partial(_ln_linear_kernel, eps=eps, activation=activation),
        out_shape=jax.ShapeDtypeStruct((M_pad, N_pad), out_dtype),
        grid=(M_pad // tm, N_pad // tn),
        in_specs=[
            pl.BlockSpec((tm, K), lambda i, j: (i, 0)),
            pl.BlockSpec((1, K), lambda i, j: (0, 0)),
            pl.BlockSpec((1, K), lambda i, j: (0, 0)),
            pl.BlockSpec((K, tn), lambda i, j: (0, j)),
            pl.BlockSpec((1, tn), lambda i, j: (0, j)),
        ],
        out_specs=pl.BlockSpec((tm, tn), lambda i, j: (i, j)),
        compiler_params=pltpu.CompilerParams(
            dimension_semantics=("parallel", "parallel")),
        cost_estimate=pl.CostEstimate(flops=flops, transcendentals=transcend,
                                      bytes_accessed=bytes_acc),
    )(x, gamma.reshape(1, K), beta.reshape(1, K), w, b.reshape(1, N_pad))
    return y[:M, :N]


# --------------------------------------------------------------------------
# Kernel B: y = x @ W + b + residual   (fused residual add)
# --------------------------------------------------------------------------
def _linear_residual_kernel(x_ref, w_ref, b_ref, r_ref, o_ref):
    y = jnp.dot(x_ref[...].astype(jnp.bfloat16), w_ref[...],
                preferred_element_type=jnp.float32)
    o_ref[...] = (y + b_ref[...] + r_ref[...].astype(jnp.float32)).astype(
        o_ref.dtype)


def linear_residual(x, w, b, res, *, out_dtype=jnp.float32):
    """x: (M, K), w: (K, N), res: (M, N) -> (M, N)."""
    M, K = x.shape
    N = w.shape[1]
    tm = 256 if M >= 256 else _round_up(M, 8)
    tn = 512 if N >= 512 else N
    M_pad = _round_up(M, tm)
    N_pad = _round_up(N, tn)
    if M_pad != M:
        x = jnp.pad(x, ((0, M_pad - M), (0, 0)))
        res = jnp.pad(res, ((0, M_pad - M), (0, 0)))
    if N_pad != N:
        w = jnp.pad(w, ((0, 0), (0, N_pad - N)))
        b = jnp.pad(b, ((0, N_pad - N),))
        res = jnp.pad(res, ((0, 0), (0, N_pad - N)))
    w = w.astype(jnp.bfloat16)

    y = pl.pallas_call(
        _linear_residual_kernel,
        out_shape=jax.ShapeDtypeStruct((M_pad, N_pad), out_dtype),
        grid=(M_pad // tm, N_pad // tn),
        in_specs=[
            pl.BlockSpec((tm, K), lambda i, j: (i, 0)),
            pl.BlockSpec((K, tn), lambda i, j: (0, j)),
            pl.BlockSpec((1, tn), lambda i, j: (0, j)),
            pl.BlockSpec((tm, tn), lambda i, j: (i, j)),
        ],
        out_specs=pl.BlockSpec((tm, tn), lambda i, j: (i, j)),
        compiler_params=pltpu.CompilerParams(
            dimension_semantics=("parallel", "parallel")),
        cost_estimate=pl.CostEstimate(
            flops=2 * M_pad * K * N_pad, transcendentals=0,
            bytes_accessed=2 * M_pad * K + 2 * K * N_pad + 8 * M_pad * N_pad),
    )(x, w, b.reshape(1, N_pad), res.astype(jnp.float32))
    return y[:M, :N]


# --------------------------------------------------------------------------
# Kernel C: attention core.  softmax over the HEADS axis (dp.softmax(dim=1)).
# qkv is lane-dense (B, T, 3D); output lane-dense (B, T, D).
# --------------------------------------------------------------------------
def _attention_kernel(q_ref, kv_ref, o_ref, *, n_heads, head_dim, scale):
    D = n_heads * head_dim
    # per-head scores for this query tile: list of (tq, T) f32
    scores = []
    for h in range(n_heads):
        qh = q_ref[0, :, h * head_dim:(h + 1) * head_dim]           # (tq, Dh)
        kh = kv_ref[0, :, D + h * head_dim:D + (h + 1) * head_dim]  # (T, Dh)
        s = jax.lax.dot_general(qh, kh, (((1,), (1,)), ((), ())),
                                preferred_element_type=jnp.float32)
        scores.append(s * scale)
    # softmax across heads at every (query, key) position
    m = scores[0]
    for h in range(1, n_heads):
        m = jnp.maximum(m, scores[h])
    es = [jnp.exp(s - m) for s in scores]
    denom = es[0]
    for h in range(1, n_heads):
        denom = denom + es[h]
    inv = pl.reciprocal(denom, approx=True)
    outs = []
    for h in range(n_heads):
        vh = kv_ref[0, :, 2 * D + h * head_dim:2 * D + (h + 1) * head_dim]
        attn_h = (es[h] * inv).astype(vh.dtype)                     # (tq, T)
        outs.append(jnp.dot(attn_h, vh,
                            preferred_element_type=jnp.float32))    # (tq, Dh)
    o_ref[0] = jnp.concatenate(outs, axis=-1).astype(o_ref.dtype)   # (tq, D)


def attention_core(qkv, n_heads, head_dim):
    """qkv: (B, T, 3D) bf16 -> (B, T, D) bf16."""
    B, T, threeD = qkv.shape
    D = n_heads * head_dim
    tq = T if T <= 128 else 128
    assert T % tq == 0, "sequence length must be padded to the query tile"
    return pl.pallas_call(
        functools.partial(_attention_kernel, n_heads=n_heads,
                          head_dim=head_dim, scale=head_dim ** -0.5),
        out_shape=jax.ShapeDtypeStruct((B, T, D), jnp.bfloat16),
        grid=(B, T // tq),
        in_specs=[
            pl.BlockSpec((1, tq, threeD), lambda b, qi: (b, qi, 0)),  # q slab
            pl.BlockSpec((1, T, threeD), lambda b, qi: (b, 0, 0)),    # k/v slab
        ],
        out_specs=pl.BlockSpec((1, tq, D), lambda b, qi: (b, qi, 0)),
        compiler_params=pltpu.CompilerParams(
            dimension_semantics=("parallel", "parallel")),
        cost_estimate=pl.CostEstimate(
            flops=4 * B * n_heads * T * T * head_dim,
            transcendentals=B * n_heads * T * T,
            bytes_accessed=4 * B * T * threeD + 2 * B * T * D),
    )(qkv, qkv)


# --------------------------------------------------------------------------
# Block forward:  x = x + proj(attn(LN1(x)));  x = x + fc2(GELU(fc1(LN2(x))))
# --------------------------------------------------------------------------
def block_forward(x, p, n_heads, eps=1e-6):
    B, T, D = x.shape
    head_dim = D // n_heads
    T_pad = _round_up(T, 8) if T <= 128 else _round_up(T, 128)
    if T_pad != T:
        x = jnp.pad(x, ((0, 0), (0, T_pad - T), (0, 0)))
    x2d = x.reshape(B * T_pad, D)

    # --- attention branch ---
    qkv = ln_linear(x2d, p["ln1_g"], p["ln1_b"], p["qkv_w"], p["qkv_b"],
                    out_dtype=jnp.bfloat16, eps=eps)          # (M, 3D) bf16
    qkv = qkv.reshape(B, T_pad, 3 * D)
    if T_pad != T:
        # zero padded token rows so padded keys/values contribute nothing
        valid = (jnp.arange(T_pad) < T)[None, :, None]
        qkv = jnp.where(valid, qkv, jnp.zeros((), qkv.dtype))
    attn = attention_core(qkv, n_heads, head_dim)             # (B, T_pad, D)
    x2d = linear_residual(attn.reshape(B * T_pad, D),
                          p["proj_w"], p["proj_b"], x2d)      # (M, D) f32

    # --- MLP branch ---
    h = ln_linear(x2d, p["ln2_g"], p["ln2_b"], p["fc1_w"], p["fc1_b"],
                  activation="gelu", out_dtype=jnp.bfloat16, eps=eps)
    x2d = linear_residual(h, p["fc2_w"], p["fc2_b"], x2d)     # (M, D) f32

    out = x2d.reshape(B, T_pad, D)
    return out[:, :T] if T_pad != T else out


# --------------------------------------------------------------------------
# Pure-JAX reference (same math in f32, tanh-GELU) for a sanity check.
# --------------------------------------------------------------------------
def block_reference(x, p, n_heads, eps=1e-6):
    B, T, D = x.shape
    hd = D // n_heads

    def ln(v, g, b):
        m = jnp.mean(v, -1, keepdims=True)
        c = v - m
        var = jnp.mean(c * c, -1, keepdims=True)
        return c * jax.lax.rsqrt(var + eps) * g + b

    y = ln(x, p["ln1_g"], p["ln1_b"])
    qkv = y @ p["qkv_w"] + p["qkv_b"]
    qkv = qkv.reshape(B, T, 3, n_heads, hd).transpose(2, 0, 3, 1, 4)
    q, k, v = qkv[0], qkv[1], qkv[2]
    dp = jnp.einsum("bhqd,bhkd->bhqk", q, k) * hd ** -0.5
    attn = jax.nn.softmax(dp, axis=1)          # softmax over HEADS (dim=1)
    w = jnp.einsum("bhqk,bhkd->bhqd", attn, v)
    w = w.transpose(0, 2, 1, 3).reshape(B, T, D)
    x = x + w @ p["proj_w"] + p["proj_b"]

    y = ln(x, p["ln2_g"], p["ln2_b"])
    hdn = y @ p["fc1_w"] + p["fc1_b"]
    c = 0.7978845608028654
    hdn = 0.5 * hdn * (1.0 + jnp.tanh(c * (hdn + 0.044715 * hdn ** 3)))
    x = x + hdn @ p["fc2_w"] + p["fc2_b"]
    return x


# --------------------------------------------------------------------------
if __name__ == "__main__":
    B, T, D, H = 2, 8, 32, 4          # (n_samples, n_patches+1, dim), n_heads
    hid = int(D * 4.0)                # mlp_ratio = 4.0

    key = jax.random.PRNGKey(0)
    ks = jax.random.split(key, 10)
    nrm = lambda k, shape: 0.02 * jax.random.normal(k, shape, jnp.float32)

    params = {
        "ln1_g": jnp.ones((D,), jnp.float32),
        "ln1_b": jnp.zeros((D,), jnp.float32),
        "qkv_w": nrm(ks[0], (D, 3 * D)),
        "qkv_b": nrm(ks[1], (3 * D,)),
        "proj_w": nrm(ks[2], (D, D)),
        "proj_b": nrm(ks[3], (D,)),
        "ln2_g": jnp.ones((D,), jnp.float32),
        "ln2_b": jnp.zeros((D,), jnp.float32),
        "fc1_w": nrm(ks[4], (D, hid)),
        "fc1_b": nrm(ks[5], (hid,)),
        "fc2_w": nrm(ks[6], (hid, D)),
        "fc2_b": nrm(ks[7], (D,)),
    }
    x = jax.random.normal(ks[8], (B, T, D), jnp.float32)

    fwd = jax.jit(functools.partial(block_forward, n_heads=H))
    out = fwd(x, params)
    jax.block_until_ready(out)
    assert out.shape == (B, T, D)

    ref = block_reference(x, params, H)
    err = float(jnp.max(jnp.abs(out - ref)))
    assert err < 2e-2, f"max abs error vs reference: {err}"
    print("KERNEL_OK")
</pallas_src>

<mosaic_0001>
module attributes {stable_mosaic.version = 11 : i64} {
  func.func @_linear_residual_kernel(%arg0: i32, %arg1: i32, %arg2: memref<16x32xbf16, #tpu.memory_space<vmem>>, %arg3: memref<32x32xbf16, #tpu.memory_space<vmem>>, %arg4: memref<1x32xf32, #tpu.memory_space<vmem>>, %arg5: memref<16x32xf32, #tpu.memory_space<vmem>>, %arg6: memref<16x32xf32, #tpu.memory_space<vmem>>) attributes {dimension_semantics = [#tpu.dimension_semantics<parallel>, #tpu.dimension_semantics<parallel>], iteration_bounds = array<i64: 1, 1>, scalar_prefetch = 0 : i64, scratch_operands = 0 : i64, tpu.core_type = #tpu.core_type<tc>, window_params = [{transform_indices = @transform_0, window_bounds = array<i64: 16, 32>}, {transform_indices = @transform_1, window_bounds = array<i64: 32, 32>}, {transform_indices = @transform_2, window_bounds = array<i64: 1, 32>}, {transform_indices = @transform_3, window_bounds = array<i64: 16, 32>}, {transform_indices = @transform_4, window_bounds = array<i64: 16, 32>}]} {
    %c0 = arith.constant 0 : index
    %c0_0 = arith.constant 0 : index
    %0 = vector.load %arg2[%c0, %c0_0] : memref<16x32xbf16, #tpu.memory_space<vmem>>, vector<16x32xbf16>
    %c0_1 = arith.constant 0 : index
    %c0_2 = arith.constant 0 : index
    %1 = vector.load %arg3[%c0_1, %c0_2] : memref<32x32xbf16, #tpu.memory_space<vmem>>, vector<32x32xbf16>
    %cst = arith.constant dense<0.000000e+00> : vector<16x32xf32>
    %2 = tpu.matmul %0, %1, %cst {dimension_numbers = #tpu.dot_dimension_numbers<[1], [0], [0], [1], [0, 0, 1, 1], [], []>} : vector<16x32xbf16>, vector<32x32xbf16>, vector<16x32xf32> -> vector<16x32xf32>
    %c0_3 = arith.constant 0 : index
    %c0_4 = arith.constant 0 : index
    %3 = vector.load %arg4[%c0_3, %c0_4] : memref<1x32xf32, #tpu.memory_space<vmem>>, vector<1x32xf32>
    %4 = vector.broadcast %3 : vector<1x32xf32> to vector<16x32xf32>
    %5 = arith.addf %2, %4 : vector<16x32xf32>
    %c0_5 = arith.constant 0 : index
    %c0_6 = arith.constant 0 : index
    %6 = vector.load %arg5[%c0_5, %c0_6] : memref<16x32xf32, #tpu.memory_space<vmem>>, vector<16x32xf32>
    %7 = arith.addf %5, %6 : vector<16x32xf32>
    %c0_7 = arith.constant 0 : index
    %c0_8 = arith.constant 0 : index
    %8 = vector.load %arg6[%c0_7, %c0_8] : memref<16x32xf32, #tpu.memory_space<vmem>>, vector<16x32xf32>
    tpu.vector_store %arg6[%c0_7, %c0_8], %7 {strides = array<i32>} : memref<16x32xf32, #tpu.memory_space<vmem>>, vector<16x32xf32>,
    return
  }
  func.func @transform_0(%arg0: i32, %arg1: i32) -> (i32, i32) {
    %c0_i32 = arith.constant 0 : i32
    %c0_i32_0 = arith.constant 0 : i32
    return %arg0, %c0_i32 : i32, i32
  }
  func.func @transform_1(%arg0: i32, %arg1: i32) -> (i32, i32) {
    %c0_i32 = arith.constant 0 : i32
    %c0_i32_0 = arith.constant 0 : i32
    return %c0_i32, %arg1 : i32, i32
  }
  func.func @transform_2(%arg0: i32, %arg1: i32) -> (i32, i32) {
    %c0_i32 = arith.constant 0 : i32
    %c0_i32_0 = arith.constant 0 : i32
    return %c0_i32, %arg1 : i32, i32
  }
  func.func @transform_3(%arg0: i32, %arg1: i32) -> (i32, i32) {
    %c0_i32 = arith.constant 0 : i32
    return %arg0, %arg1 : i32, i32
  }
  func.func @transform_4(%arg0: i32, %arg1: i32) -> (i32, i32) {
    %c0_i32 = arith.constant 0 : i32
    return %arg0, %arg1 : i32, i32
  }
}

module attributes {stable_mosaic.version = 11 : i64} {
  func.func @_ln_linear_kernel(%arg0: i32, %arg1: i32, %arg2: memref<16x32xf32, #tpu.memory_space<vmem>>, %arg3: memref<1x32xf32, #tpu.memory_space<vmem>>, %arg4: memref<1x32xf32, #tpu.memory_space<vmem>>, %arg5: memref<32x96xbf16, #tpu.memory_space<vmem>>, %arg6: memref<1x96xf32, #tpu.memory_space<vmem>>, %arg7: memref<16x96xbf16, #tpu.memory_space<vmem>>) attributes {dimension_semantics = [#tpu.dimension_semantics<parallel>, #tpu.dimension_semantics<parallel>], iteration_bounds = array<i64: 1, 1>, scalar_prefetch = 0 : i64, scratch_operands = 0 : i64, tpu.core_type = #tpu.core_type<tc>, window_params = [{transform_indices = @transform_0, window_bounds = array<i64: 16, 32>}, {pipeline_mode = #tpu.pipeline_mode<synchronous>, transform_indices = @transform_1, window_bounds = array<i64: 1, 32>}, {pipeline_mode = #tpu.pipeline_mode<synchronous>, transform_indices = @transform_2, window_bounds = array<i64: 1, 32>}, {transform_indices = @transform_3, window_bounds = array<i64: 32, 96>}, {transform_indices = @transform_4, window_bounds = array<i64: 1, 96>}, {transform_indices = @transform_5, window_bounds = array<i64: 16, 96>}]} {
    %c0 = arith.constant 0 : index
    %c0_0 = arith.constant 0 : index
    %0 = vector.load %arg2[%c0, %c0_0] : memref<16x32xf32, #tpu.memory_space<vmem>>, vector<16x32xf32>
    %cst = arith.constant dense<0.000000e+00> : vector<16xf32>
    %1 = vector.multi_reduction <add>, %0, %cst [1] : vector<16x32xf32> to vector<16xf32>
    %2 = vector.shape_cast %1 : vector<16xf32> to vector<16x1xf32>
    %cst_1 = arith.constant 3.200000e+01 : f32
    %3 = vector.broadcast %cst_1 : f32 to vector<16x1xf32>
    %4 = arith.divf %2, %3 : vector<16x1xf32>
    %5 = vector.broadcast %4 : vector<16x1xf32> to vector<16x32xf32>
    %6 = arith.subf %0, %5 : vector<16x32xf32>
    %7 = arith.mulf %6, %6 : vector<16x32xf32>
    %cst_2 = arith.constant dense<0.000000e+00> : vector<16xf32>
    %8 = vector.multi_reduction <add>, %7, %cst_2 [1] : vector<16x32xf32> to vector<16xf32>
    %9 = vector.shape_cast %8 : vector<16xf32> to vector<16x1xf32>
    %cst_3 = arith.constant 3.200000e+01 : f32
    %10 = vector.broadcast %cst_3 : f32 to vector<16x1xf32>
    %11 = arith.divf %9, %10 : vector<16x1xf32>
    %cst_4 = arith.constant 9.99999997E-7 : f32
    %12 = vector.broadcast %cst_4 : f32 to vector<16x1xf32>
    %13 = arith.addf %11, %12 : vector<16x1xf32>
    %14 = math.rsqrt %13 : vector<16x1xf32>
    %15 = vector.broadcast %14 : vector<16x1xf32> to vector<16x32xf32>
    %16 = arith.mulf %6, %15 : vector<16x32xf32>
    %c0_5 = arith.constant 0 : index
    %c0_6 = arith.constant 0 : index
    %17 = vector.load %arg3[%c0_5, %c0_6] : memref<1x32xf32, #tpu.memory_space<vmem>>, vector<1x32xf32>
    %18 = vector.broadcast %17 : vector<1x32xf32> to vector<16x32xf32>
    %19 = arith.mulf %16, %18 : vector<16x32xf32>
    %c0_7 = arith.constant 0 : index
    %c0_8 = arith.constant 0 : index
    %20 = vector.load %arg4[%c0_7, %c0_8] : memref<1x32xf32, #tpu.memory_space<vmem>>, vector<1x32xf32>
    %21 = vector.broadcast %20 : vector<1x32xf32> to vector<16x32xf32>
    %22 = arith.addf %19, %21 : vector<16x32xf32>
    %23 = arith.truncf %22 : vector<16x32xf32> to vector<16x32xbf16>
    %c0_9 = arith.constant 0 : index
    %c0_10 = arith.constant 0 : index
    %24 = vector.load %arg5[%c0_9, %c0_10] : memref<32x96xbf16, #tpu.memory_space<vmem>>, vector<32x96xbf16>
    %cst_11 = arith.constant dense<0.000000e+00> : vector<16x96xf32>
    %25 = tpu.matmul %23, %24, %cst_11 {dimension_numbers = #tpu.dot_dimension_numbers<[1], [0], [0], [1], [0, 0, 1, 1], [], []>} : vector<16x32xbf16>, vector<32x96xbf16>, vector<16x96xf32> -> vector<16x96xf32>
    %c0_12 = arith.constant 0 : index
    %c0_13 = arith.constant 0 : index
    %26 = vector.load %arg6[%c0_12, %c0_13] : memref<1x96xf32, #tpu.memory_space<vmem>>, vector<1x96xf32>
    %27 = vector.broadcast %26 : vector<1x96xf32> to vector<16x96xf32>
    %28 = arith.addf %25, %27 : vector<16x96xf32>
    %29 = arith.truncf %28 : vector<16x96xf32> to vector<16x96xbf16>
    %c0_14 = arith.constant 0 : index
    %c0_15 = arith.constant 0 : index
    %30 = vector.load %arg7[%c0_14, %c0_15] : memref<16x96xbf16, #tpu.memory_space<vmem>>, vector<16x96xbf16>
    tpu.vector_store %arg7[%c0_14, %c0_15], %29 {strides = array<i32>} : memref<16x96xbf16, #tpu.memory_space<vmem>>, vector<16x96xbf16>,
    return
  }
  func.func @transform_0(%arg0: i32, %arg1: i32) -> (i32, i32) {
    %c0_i32 = arith.constant 0 : i32
    %c0_i32_0 = arith.constant 0 : i32
    return %arg0, %c0_i32 : i32, i32
  }
  func.func @transform_1(%arg0: i32, %arg1: i32) -> (i32, i32) {
    %c0_i32 = arith.constant 0 : i32
    %c0_i32_0 = arith.constant 0 : i32
    %c0_i32_1 = arith.constant 0 : i32
    return %c0_i32, %c0_i32_0 : i32, i32
  }
  func.func @transform_2(%arg0: i32, %arg1: i32) -> (i32, i32) {
    %c0_i32 = arith.constant 0 : i32
    %c0_i32_0 = arith.constant 0 : i32
    %c0_i32_1 = arith.constant 0 : i32
    return %c0_i32, %c0_i32_0 : i32, i32
  }
  func.func @transform_3(%arg0: i32, %arg1: i32) -> (i32, i32) {
    %c0_i32 = arith.constant 0 : i32
    %c0_i32_0 = arith.constant 0 : i32
    return %c0_i32, %arg1 : i32, i32
  }
  func.func @transform_4(%arg0: i32, %arg1: i32) -> (i32, i32) {
    %c0_i32 = arith.constant 0 : i32
    %c0_i32_0 = arith.constant 0 : i32
    return %c0_i32, %arg1 : i32, i32
  }
  func.func @transform_5(%arg0: i32, %arg1: i32) -> (i32, i32) {
    %c0_i32 = arith.constant 0 : i32
    return %arg0, %arg1 : i32, i32
  }
}

module attributes {stable_mosaic.version = 11 : i64} {
  func.func @_attention_kernel(%arg0: i32, %arg1: i32, %arg2: memref<1x8x96xbf16, #tpu.memory_space<vmem>>, %arg3: memref<1x8x96xbf16, #tpu.memory_space<vmem>>, %arg4: memref<1x8x32xbf16, #tpu.memory_space<vmem>>) attributes {dimension_semantics = [#tpu.dimension_semantics<parallel>, #tpu.dimension_semantics<parallel>], iteration_bounds = array<i64: 2, 1>, scalar_prefetch = 0 : i64, scratch_operands = 0 : i64, tpu.core_type = #tpu.core_type<tc>, window_params = [{transform_indices = @transform_0, window_bounds = array<i64: 1, 8, 96>}, {transform_indices = @transform_1, window_bounds = array<i64: 1, 8, 96>}, {transform_indices = @transform_2, window_bounds = array<i64: 1, 8, 32>}]} {
    %c0 = arith.constant 0 : index
    %c0_0 = arith.constant 0 : index
    %c0_1 = arith.constant 0 : index
    %0 = vector.load %arg2[%c0, %c0_0, %c0_1] : memref<1x8x96xbf16, #tpu.memory_space<vmem>>, vector<1x8x8xbf16>
    %1 = vector.shape_cast %0 : vector<1x8x8xbf16> to vector<8x8xbf16>
    %c0_2 = arith.constant 0 : index
    %c0_3 = arith.constant 0 : index
    %c32 = arith.constant 32 : index
    %2 = vector.load %arg3[%c0_2, %c0_3, %c32] : memref<1x8x96xbf16, #tpu.memory_space<vmem>>, vector<1x8x8xbf16>
    %3 = vector.shape_cast %2 : vector<1x8x8xbf16> to vector<8x8xbf16>
    %cst = arith.constant dense<0.000000e+00> : vector<8x8xf32>
    %4 = tpu.matmul %1, %3, %cst {dimension_numbers = #tpu.dot_dimension_numbers<[1], [1], [0], [0], [0, 0, 1, 0], [], []>} : vector<8x8xbf16>, vector<8x8xbf16>, vector<8x8xf32> -> vector<8x8xf32>
    %cst_4 = arith.constant 0.353553385 : f32
    %5 = vector.broadcast %cst_4 : f32 to vector<8x8xf32>
    %6 = arith.mulf %4, %5 : vector<8x8xf32>
    %c0_5 = arith.constant 0 : index
    %c0_6 = arith.constant 0 : index
    %c8 = arith.constant 8 : index
    %7 = vector.load %arg2[%c0_5, %c0_6, %c8] : memref<1x8x96xbf16, #tpu.memory_space<vmem>>, vector<1x8x8xbf16>
    %8 = vector.shape_cast %7 : vector<1x8x8xbf16> to vector<8x8xbf16>
    %c0_7 = arith.constant 0 : index
    %c0_8 = arith.constant 0 : index
    %c40 = arith.constant 40 : index
    %9 = vector.load %arg3[%c0_7, %c0_8, %c40] : memref<1x8x96xbf16, #tpu.memory_space<vmem>>, vector<1x8x8xbf16>
    %10 = vector.shape_cast %9 : vector<1x8x8xbf16> to vector<8x8xbf16>
    %cst_9 = arith.constant dense<0.000000e+00> : vector<8x8xf32>
    %11 = tpu.matmul %8, %10, %cst_9 {dimension_numbers = #tpu.dot_dimension_numbers<[1], [1], [0], [0], [0, 0, 1, 0], [], []>} : vector<8x8xbf16>, vector<8x8xbf16>, vector<8x8xf32> -> vector<8x8xf32>
    %cst_10 = arith.constant 0.353553385 : f32
    %12 = vector.broadcast %cst_10 : f32 to vector<8x8xf32>
    %13 = arith.mulf %11, %12 : vector<8x8xf32>
    %c0_11 = arith.constant 0 : index
    %c0_12 = arith.constant 0 : index
    %c16 = arith.constant 16 : index
    %14 = vector.load %arg2[%c0_11, %c0_12, %c16] : memref<1x8x96xbf16, #tpu.memory_space<vmem>>, vector<1x8x8xbf16>
    %15 = vector.shape_cast %14 : vector<1x8x8xbf16> to vector<8x8xbf16>
    %c0_13 = arith.constant 0 : index
    %c0_14 = arith.constant 0 : index
    %c48 = arith.constant 48 : index
    %16 = vector.load %arg3[%c0_13, %c0_14, %c48] : memref<1x8x96xbf16, #tpu.memory_space<vmem>>, vector<1x8x8xbf16>
    %17 = vector.shape_cast %16 : vector<1x8x8xbf16> to vector<8x8xbf16>
    %cst_15 = arith.constant dense<0.000000e+00> : vector<8x8xf32>
    %18 = tpu.matmul %15, %17, %cst_15 {dimension_numbers = #tpu.dot_dimension_numbers<[1], [1], [0], [0], [0, 0, 1, 0], [], []>} : vector<8x8xbf16>, vector<8x8xbf16>, vector<8x8xf32> -> vector<8x8xf32>
    %cst_16 = arith.constant 0.353553385 : f32
    %19 = vector.broadcast %cst_16 : f32 to vector<8x8xf32>
    %20 = arith.mulf %18, %19 : vector<8x8xf32>
    %c0_17 = arith.constant 0 : index
    %c0_18 = arith.constant 0 : index
    %c24 = arith.constant 24 : index
    %21 = vector.load %arg2[%c0_17, %c0_18, %c24] : memref<1x8x96xbf16, #tpu.memory_space<vmem>>, vector<1x8x8xbf16>
    %22 = vector.shape_cast %21 : vector<1x8x8xbf16> to vector<8x8xbf16>
    %c0_19 = arith.constant 0 : index
    %c0_20 = arith.constant 0 : index
    %c56 = arith.constant 56 : index
    %23 = vector.load %arg3[%c0_19, %c0_20, %c56] : memref<1x8x96xbf16, #tpu.memory_space<vmem>>, vector<1x8x8xbf16>
    %24 = vector.shape_cast %23 : vector<1x8x8xbf16> to vector<8x8xbf16>
    %cst_21 = arith.constant dense<0.000000e+00> : vector<8x8xf32>
    %25 = tpu.matmul %22, %24, %cst_21 {dimension_numbers = #tpu.dot_dimension_numbers<[1], [1], [0], [0], [0, 0, 1, 0], [], []>} : vector<8x8xbf16>, vector<8x8xbf16>, vector<8x8xf32> -> vector<8x8xf32>
    %cst_22 = arith.constant 0.353553385 : f32
    %26 = vector.broadcast %cst_22 : f32 to vector<8x8xf32>
    %27 = arith.mulf %25, %26 : vector<8x8xf32>
    %28 = arith.maximumf %6, %13 : vector<8x8xf32>
    %29 = arith.maximumf %28, %20 : vector<8x8xf32>
    %30 = arith.maximumf %29, %27 : vector<8x8xf32>
    %31 = arith.subf %6, %30 : vector<8x8xf32>
    %32 = math.exp %31 : vector<8x8xf32>
    %33 = arith.subf %13, %30 : vector<8x8xf32>
    %34 = math.exp %33 : vector<8x8xf32>
    %35 = arith.subf %20, %30 : vector<8x8xf32>
    %36 = math.exp %35 : vector<8x8xf32>
    %37 = arith.subf %27, %30 : vector<8x8xf32>
    %38 = math.exp %37 : vector<8x8xf32>
    %39 = arith.addf %32, %34 : vector<8x8xf32>
    %40 = arith.addf %39, %36 : vector<8x8xf32>
    %41 = arith.addf %40, %38 : vector<8x8xf32>
    %42 = tpu.reciprocal %41 {approx = true} : vector<8x8xf32> -> vector<8x8xf32>
    %c0_23 = arith.constant 0 : index
    %c0_24 = arith.constant 0 : index
    %c64 = arith.constant 64 : index
    %43 = vector.load %arg3[%c0_23, %c0_24, %c64] : memref<1x8x96xbf16, #tpu.memory_space<vmem>>, vector<1x8x8xbf16>
    %44 = vector.shape_cast %43 : vector<1x8x8xbf16> to vector<8x8xbf16>
    %45 = arith.mulf %32, %42 : vector<8x8xf32>
    %46 = arith.truncf %45 : vector<8x8xf32> to vector<8x8xbf16>
    %cst_25 = arith.constant dense<0.000000e+00> : vector<8x8xf32>
    %47 = tpu.matmul %46, %44, %cst_25 {dimension_numbers = #tpu.dot_dimension_numbers<[1], [0], [0], [1], [0, 0, 1, 1], [], []>} : vector<8x8xbf16>, vector<8x8xbf16>, vector<8x8xf32> -> vector<8x8xf32>
    %c0_26 = arith.constant 0 : index
    %c0_27 = arith.constant 0 : index
    %c72 = arith.constant 72 : index
    %48 = vector.load %arg3[%c0_26, %c0_27, %c72] : memref<1x8x96xbf16, #tpu.memory_space<vmem>>, vector<1x8x8xbf16>
    %49 = vector.shape_cast %48 : vector<1x8x8xbf16> to vector<8x8xbf16>
    %50 = arith.mulf %34, %42 : vector<8x8xf32>
    %51 = arith.truncf %50 : vector<8x8xf32> to vector<8x8xbf16>
    %cst_28 = arith.constant dense<0.000000e+00> : vector<8x8xf32>
    %52 = tpu.matmul %51, %49, %cst_28 {dimension_numbers = #tpu.dot_dimension_numbers<[1], [0], [0], [1], [0, 0, 1, 1], [], []>} : vector<8x8xbf16>, vector<8x8xbf16>, vector<8x8xf32> -> vector<8x8xf32>
    %c0_29 = arith.constant 0 : index
    %c0_30 = arith.constant 0 : index
    %c80 = arith.constant 80 : index
    %53 = vector.load %arg3[%c0_29, %c0_30, %c80] : memref<1x8x96xbf16, #tpu.memory_space<vmem>>, vector<1x8x8xbf16>
    %54 = vector.shape_cast %53 : vector<1x8x8xbf16> to vector<8x8xbf16>
    %55 = arith.mulf %36, %42 : vector<8x8xf32>
    %56 = arith.truncf %55 : vector<8x8xf32> to vector<8x8xbf16>
    %cst_31 = arith.constant dense<0.000000e+00> : vector<8x8xf32>
    %57 = tpu.matmul %56, %54, %cst_31 {dimension_numbers = #tpu.dot_dimension_numbers<[1], [0], [0], [1], [0, 0, 1, 1], [], []>} : vector<8x8xbf16>, vector<8x8xbf16>, vector<8x8xf32> -> vector<8x8xf32>
    %c0_32 = arith.constant 0 : index
    %c0_33 = arith.constant 0 : index
    %c88 = arith.constant 88 : index
    %58 = vector.load %arg3[%c0_32, %c0_33, %c88] : memref<1x8x96xbf16, #tpu.memory_space<vmem>>, vector<1x8x8xbf16>
    %59 = vector.shape_cast %58 : vector<1x8x8xbf16> to vector<8x8xbf16>
    %60 = arith.mulf %38, %42 : vector<8x8xf32>
    %61 = arith.truncf %60 : vector<8x8xf32> to vector<8x8xbf16>
    %cst_34 = arith.constant dense<0.000000e+00> : vector<8x8xf32>
    %62 = tpu.matmul %61, %59, %cst_34 {dimension_numbers = #tpu.dot_dimension_numbers<[1], [0], [0], [1], [0, 0, 1, 1], [], []>} : vector<8x8xbf16>, vector<8x8xbf16>, vector<8x8xf32> -> vector<8x8xf32>
    %63 = tpu.concatenate %47, %52, %57, %62 in 1 : vector<8x8xf32>, vector<8x8xf32>, vector<8x8xf32>, vector<8x8xf32> -> vector<8x32xf32>
    %64 = arith.truncf %63 : vector<8x32xf32> to vector<8x32xbf16>
    %c0_35 = arith.constant 0 : index
    %c0_36 = arith.constant 0 : index
    %c0_37 = arith.constant 0 : index
    %65 = vector.load %arg4[%c0_35, %c0_36, %c0_37] : memref<1x8x32xbf16, #tpu.memory_space<vmem>>, vector<1x8x32xbf16>
    %66 = vector.shape_cast %65 : vector<1x8x32xbf16> to vector<8x32xbf16>
    %67 = vector.shape_cast %64 : vector<8x32xbf16> to vector<1x8x32xbf16>
    tpu.vector_store %arg4[%c0_35, %c0_36, %c0_37], %67 {strides = array<i32>} : memref<1x8x32xbf16, #tpu.memory_space<vmem>>, vector<1x8x32xbf16>,
    return
  }
  func.func @transform_0(%arg0: i32, %arg1: i32) -> (i32, i32, i32) {
    %c0_i32 = arith.constant 0 : i32
    %c0_i32_0 = arith.constant 0 : i32
    return %arg0, %arg1, %c0_i32 : i32, i32, i32
  }
  func.func @transform_1(%arg0: i32, %arg1: i32) -> (i32, i32, i32) {
    %c0_i32 = arith.constant 0 : i32
    %c0_i32_0 = arith.constant 0 : i32
    %c0_i32_1 = arith.constant 0 : i32
    return %arg0, %c0_i32, %c0_i32_0 : i32, i32, i32
  }
  func.func @transform_2(%arg0: i32, %arg1: i32) -> (i32, i32, i32) {
    %c0_i32 = arith.constant 0 : i32
    %c0_i32_0 = arith.constant 0 : i32
    return %arg0, %arg1, %c0_i32 : i32, i32, i32
  }
}

module attributes {stable_mosaic.version = 11 : i64} {
  func.func @_ln_linear_kernel(%arg0: i32, %arg1: i32, %arg2: memref<16x32xf32, #tpu.memory_space<vmem>>, %arg3: memref<1x32xf32, #tpu.memory_space<vmem>>, %arg4: memref<1x32xf32, #tpu.memory_space<vmem>>, %arg5: memref<32x128xbf16, #tpu.memory_space<vmem>>, %arg6: memref<1x128xf32, #tpu.memory_space<vmem>>, %arg7: memref<16x128xbf16, #tpu.memory_space<vmem>>) attributes {dimension_semantics = [#tpu.dimension_semantics<parallel>, #tpu.dimension_semantics<parallel>], iteration_bounds = array<i64: 1, 1>, scalar_prefetch = 0 : i64, scratch_operands = 0 : i64, tpu.core_type = #tpu.core_type<tc>, window_params = [{transform_indices = @transform_0, window_bounds = array<i64: 16, 32>}, {pipeline_mode = #tpu.pipeline_mode<synchronous>, transform_indices = @transform_1, window_bounds = array<i64: 1, 32>}, {pipeline_mode = #tpu.pipeline_mode<synchronous>, transform_indices = @transform_2, window_bounds = array<i64: 1, 32>}, {transform_indices = @transform_3, window_bounds = array<i64: 32, 128>}, {transform_indices = @transform_4, window_bounds = array<i64: 1, 128>}, {transform_indices = @transform_5, window_bounds = array<i64: 16, 128>}]} {
    %c0 = arith.constant 0 : index
    %c0_0 = arith.constant 0 : index
    %0 = vector.load %arg2[%c0, %c0_0] : memref<16x32xf32, #tpu.memory_space<vmem>>, vector<16x32xf32>
    %cst = arith.constant dense<0.000000e+00> : vector<16xf32>
    %1 = vector.multi_reduction <add>, %0, %cst [1] : vector<16x32xf32> to vector<16xf32>
    %2 = vector.shape_cast %1 : vector<16xf32> to vector<16x1xf32>
    %cst_1 = arith.constant 3.200000e+01 : f32
    %3 = vector.broadcast %cst_1 : f32 to vector<16x1xf32>
    %4 = arith.divf %2, %3 : vector<16x1xf32>
    %5 = vector.broadcast %4 : vector<16x1xf32> to vector<16x32xf32>
    %6 = arith.subf %0, %5 : vector<16x32xf32>
    %7 = arith.mulf %6, %6 : vector<16x32xf32>
    %cst_2 = arith.constant dense<0.000000e+00> : vector<16xf32>
    %8 = vector.multi_reduction <add>, %7, %cst_2 [1] : vector<16x32xf32> to vector<16xf32>
    %9 = vector.shape_cast %8 : vector<16xf32> to vector<16x1xf32>
    %cst_3 = arith.constant 3.200000e+01 : f32
    %10 = vector.broadcast %cst_3 : f32 to vector<16x1xf32>
    %11 = arith.divf %9, %10 : vector<16x1xf32>
    %cst_4 = arith.constant 9.99999997E-7 : f32
    %12 = vector.broadcast %cst_4 : f32 to vector<16x1xf32>
    %13 = arith.addf %11, %12 : vector<16x1xf32>
    %14 = math.rsqrt %13 : vector<16x1xf32>
    %15 = vector.broadcast %14 : vector<16x1xf32> to vector<16x32xf32>
    %16 = arith.mulf %6, %15 : vector<16x32xf32>
    %c0_5 = arith.constant 0 : index
    %c0_6 = arith.constant 0 : index
    %17 = vector.load %arg3[%c0_5, %c0_6] : memref<1x32xf32, #tpu.memory_space<vmem>>, vector<1x32xf32>
    %18 = vector.broadcast %17 : vector<1x32xf32> to vector<16x32xf32>
    %19 = arith.mulf %16, %18 : vector<16x32xf32>
    %c0_7 = arith.constant 0 : index
    %c0_8 = arith.constant 0 : index
    %20 = vector.load %arg4[%c0_7, %c0_8] : memref<1x32xf32, #tpu.memory_space<vmem>>, vector<1x32xf32>
    %21 = vector.broadcast %20 : vector<1x32xf32> to vector<16x32xf32>
    %22 = arith.addf %19, %21 : vector<16x32xf32>
    %23 = arith.truncf %22 : vector<16x32xf32> to vector<16x32xbf16>
    %c0_9 = arith.constant 0 : index
    %c0_10 = arith.constant 0 : index
    %24 = vector.load %arg5[%c0_9, %c0_10] : memref<32x128xbf16, #tpu.memory_space<vmem>>, vector<32x128xbf16>
    %cst_11 = arith.constant dense<0.000000e+00> : vector<16x128xf32>
    %25 = tpu.matmul %23, %24, %cst_11 {dimension_numbers = #tpu.dot_dimension_numbers<[1], [0], [0], [1], [0, 0, 1, 1], [], []>} : vector<16x32xbf16>, vector<32x128xbf16>, vector<16x128xf32> -> vector<16x128xf32>
    %c0_12 = arith.constant 0 : index
    %c0_13 = arith.constant 0 : index
    %26 = vector.load %arg6[%c0_12, %c0_13] : memref<1x128xf32, #tpu.memory_space<vmem>>, vector<1x128xf32>
    %27 = vector.broadcast %26 : vector<1x128xf32> to vector<16x128xf32>
    %28 = arith.addf %25, %27 : vector<16x128xf32>
    %cst_14 = arith.constant 5.000000e-01 : f32
    %29 = vector.broadcast %cst_14 : f32 to vector<16x128xf32>
    %30 = arith.mulf %29, %28 : vector<16x128xf32>
    %cst_15 = arith.constant 4.471500e-02 : f32
    %31 = vector.broadcast %cst_15 : f32 to vector<16x128xf32>
    %32 = arith.mulf %31, %28 : vector<16x128xf32>
    %33 = arith.mulf %32, %28 : vector<16x128xf32>
    %34 = arith.mulf %33, %28 : vector<16x128xf32>
    %35 = arith.addf %28, %34 : vector<16x128xf32>
    %cst_16 = arith.constant 0.797884583 : f32
    %36 = vector.broadcast %cst_16 : f32 to vector<16x128xf32>
    %37 = arith.mulf %36, %35 : vector<16x128xf32>
    %38 = math.tanh %37 : vector<16x128xf32>
    %cst_17 = arith.constant 1.000000e+00 : f32
    %39 = vector.broadcast %cst_17 : f32 to vector<16x128xf32>
    %40 = arith.addf %39, %38 : vector<16x128xf32>
    %41 = arith.mulf %30, %40 : vector<16x128xf32>
    %42 = arith.truncf %41 : vector<16x128xf32> to vector<16x128xbf16>
    %c0_18 = arith.constant 0 : index
    %c0_19 = arith.constant 0 : index
    %43 = vector.load %arg7[%c0_18, %c0_19] : memref<16x128xbf16, #tpu.memory_space<vmem>>, vector<16x128xbf16>
    tpu.vector_store %arg7[%c0_18, %c0_19], %42 {strides = array<i32>} : memref<16x128xbf16, #tpu.memory_space<vmem>>, vector<16x128xbf16>,
    return
  }
  func.func @transform_0(%arg0: i32, %arg1: i32) -> (i32, i32) {
    %c0_i32 = arith.constant 0 : i32
    %c0_i32_0 = arith.constant 0 : i32
    return %arg0, %c0_i32 : i32, i32
  }
  func.func @transform_1(%arg0: i32, %arg1: i32) -> (i32, i32) {
    %c0_i32 = arith.constant 0 : i32
    %c0_i32_0 = arith.constant 0 : i32
    %c0_i32_1 = arith.constant 0 : i32
    return %c0_i32, %c0_i32_0 : i32, i32
  }
  func.func @transform_2(%arg0: i32, %arg1: i32) -> (i32, i32) {
    %c0_i32 = arith.constant 0 : i32
    %c0_i32_0 = arith.constant 0 : i32
    %c0_i32_1 = arith.constant 0 : i32
    return %c0_i32, %c0_i32_0 : i32, i32
  }
  func.func @transform_3(%arg0: i32, %arg1: i32) -> (i32, i32) {
    %c0_i32 = arith.constant 0 : i32
    %c0_i32_0 = arith.constant 0 : i32
    return %c0_i32, %arg1 : i32, i32
  }
  func.func @transform_4(%arg0: i32, %arg1: i32) -> (i32, i32) {
    %c0_i32 = arith.constant 0 : i32
    %c0_i32_0 = arith.constant 0 : i32
    return %c0_i32, %arg1 : i32, i32
  }
  func.func @transform_5(%arg0: i32, %arg1: i32) -> (i32, i32) {
    %c0_i32 = arith.constant 0 : i32
    return %arg0, %arg1 : i32, i32
  }
}

module attributes {stable_mosaic.version = 11 : i64} {
  func.func @_linear_residual_kernel(%arg0: i32, %arg1: i32, %arg2: memref<16x128xbf16, #tpu.memory_space<vmem>>, %arg3: memref<128x32xbf16, #tpu.memory_space<vmem>>, %arg4: memref<1x32xf32, #tpu.memory_space<vmem>>, %arg5: memref<16x32xf32, #tpu.memory_space<vmem>>, %arg6: memref<16x32xf32, #tpu.memory_space<vmem>>) attributes {dimension_semantics = [#tpu.dimension_semantics<parallel>, #tpu.dimension_semantics<parallel>], iteration_bounds = array<i64: 1, 1>, scalar_prefetch = 0 : i64, scratch_operands = 0 : i64, tpu.core_type = #tpu.core_type<tc>, window_params = [{transform_indices = @transform_0, window_bounds = array<i64: 16, 128>}, {transform_indices = @transform_1, window_bounds = array<i64: 128, 32>}, {transform_indices = @transform_2, window_bounds = array<i64: 1, 32>}, {transform_indices = @transform_3, window_bounds = array<i64: 16, 32>}, {transform_indices = @transform_4, window_bounds = array<i64: 16, 32>}]} {
    %c0 = arith.constant 0 : index
    %c0_0 = arith.constant 0 : index
    %0 = vector.load %arg2[%c0, %c0_0] : memref<16x128xbf16, #tpu.memory_space<vmem>>, vector<16x128xbf16>
    %c0_1 = arith.constant 0 : index
    %c0_2 = arith.constant 0 : index
    %1 = vector.load %arg3[%c0_1, %c0_2] : memref<128x32xbf16, #tpu.memory_space<vmem>>, vector<128x32xbf16>
    %cst = arith.constant dense<0.000000e+00> : vector<16x32xf32>
    %2 = tpu.matmul %0, %1, %cst {dimension_numbers = #tpu.dot_dimension_numbers<[1], [0], [0], [1], [0, 0, 1, 1], [], []>} : vector<16x128xbf16>, vector<128x32xbf16>, vector<16x32xf32> -> vector<16x32xf32>
    %c0_3 = arith.constant 0 : index
    %c0_4 = arith.constant 0 : index
    %3 = vector.load %arg4[%c0_3, %c0_4] : memref<1x32xf32, #tpu.memory_space<vmem>>, vector<1x32xf32>
    %4 = vector.broadcast %3 : vector<1x32xf32> to vector<16x32xf32>
    %5 = arith.addf %2, %4 : vector<16x32xf32>
    %c0_5 = arith.constant 0 : index
    %c0_6 = arith.constant 0 : index
    %6 = vector.load %arg5[%c0_5, %c0_6] : memref<16x32xf32, #tpu.memory_space<vmem>>, vector<16x32xf32>
    %7 = arith.addf %5, %6 : vector<16x32xf32>
    %c0_7 = arith.constant 0 : index
    %c0_8 = arith.constant 0 : index
    %8 = vector.load %arg6[%c0_7, %c0_8] : memref<16x32xf32, #tpu.memory_space<vmem>>, vector<16x32xf32>
    tpu.vector_store %arg6[%c0_7, %c0_8], %7 {strides = array<i32>} : memref<16x32xf32, #tpu.memory_space<vmem>>, vector<16x32xf32>,
    return
  }
  func.func @transform_0(%arg0: i32, %arg1: i32) -> (i32, i32) {
    %c0_i32 = arith.constant 0 : i32
    %c0_i32_0 = arith.constant 0 : i32
    return %arg0, %c0_i32 : i32, i32
  }
  func.func @transform_1(%arg0: i32, %arg1: i32) -> (i32, i32) {
    %c0_i32 = arith.constant 0 : i32
    %c0_i32_0 = arith.constant 0 : i32
    return %c0_i32, %arg1 : i32, i32
  }
  func.func @transform_2(%arg0: i32, %arg1: i32) -> (i32, i32) {
    %c0_i32 = arith.constant 0 : i32
    %c0_i32_0 = arith.constant 0 : i32
    return %c0_i32, %arg1 : i32, i32
  }
  func.func @transform_3(%arg0: i32, %arg1: i32) -> (i32, i32) {
    %c0_i32 = arith.constant 0 : i32
    return %arg0, %arg1 : i32, i32
  }
  func.func @transform_4(%arg0: i32, %arg1: i32) -> (i32, i32) {
    %c0_i32 = arith.constant 0 : i32
    return %arg0, %arg1 : i32, i32
  }
}

</mosaic_0001>

<llo_original>
// kernel: block_forward.5
$region0: #{block_forward.5}
  #allocation0 [shape = 'u32[]', space=smem, size = 0x4, offset = 0x4, fixed_abs, tag = 'smem constant byte address 0x4 - core index']
  #allocation1 [shape = 'u32[144,128]{1,0:T(1,128)}', space=vmem, size = 0x12000, scoped, tag = 'internal scratch']
  %s0 = inlined_call_operand.vmem [shape: f32[16,32], index: 0, kind: input, shape index: {}]
  %s1 = inlined_call_operand.vmem [shape: f32[1,32], index: 1, kind: input, shape index: {}]
  %s2 = inlined_call_operand.vmem [shape: f32[1,32], index: 2, kind: input, shape index: {}]
  %s3 = inlined_call_operand.vmem [shape: bf16[32,96], index: 3, kind: input, shape index: {}]
  %s4 = inlined_call_operand.vmem [shape: f32[1,96], index: 4, kind: input, shape index: {}]
  %s5 = inlined_call_operand.vmem [shape: bf16[16,96], index: 5, kind: output, shape index: {}]
  %s6 = sld [smem:[#allocation0]]
  $region30: #{block_forward.5} parent=0
    _
  %s8 = ssub.s32 1, %s6
  %s9 = scalar_select 0, %s8, %s6
  // Predicated region
  $region2: #{block_forward.5} parent=0 // pred_check
    _
  $region3: #{block_forward.5} parent=0 // pred_check_branch
    %11 = sbr.rel (0) target = $region5
  $region4: #{block_forward.5} parent=0 // pred_region
    _
  $region5: #{block_forward.5} parent=0 // pred_fallthru
    _
  // Predicated region
  $region6: #{block_forward.5} parent=0 // pred_check
    _
  $region7: #{block_forward.5} parent=0 // pred_check_branch
    %13 = sbr.rel (0) target = $region9
  $region8: #{block_forward.5} parent=0 // pred_region
    _
  $region9: #{block_forward.5} parent=0 // pred_fallthru
    _
  // Predicated region
  $region10: #{block_forward.5} parent=0 // pred_check
    _
  $region11: #{block_forward.5} parent=0 // pred_check_branch
    %15 = sbr.rel (0) target = $region13
  $region12: #{block_forward.5} parent=0 // pred_region
    _
  $region13: #{block_forward.5} parent=0 // pred_fallthru
    _
  // Predicated region
  $region14: #{block_forward.5} parent=0 // pred_check
    _
  $region15: #{block_forward.5} parent=0 // pred_check_branch
    %17 = sbr.rel (0) target = $region17
  $region16: #{block_forward.5} parent=0 // pred_region
    _
  $region17: #{block_forward.5} parent=0 // pred_fallthru
    _
  // Predicated region
  $region18: #{block_forward.5} parent=0 // pred_check
    _
  $region19: #{block_forward.5} parent=0 // pred_check_branch
    %19 = sbr.rel (0) target = $region21
  $region20: #{block_forward.5} parent=0 // pred_region
    _
  $region21: #{block_forward.5} parent=0 // pred_fallthru
    _
  %v21 = vld [vmem:[%s0] sm:$0xff]
  %v22 = vld [vmem:[%s0 + $0x8] sm:$0xff]
  %vm23 = vcmask 261120
  %v24 = vsel %vm23, %v21, 0.0
  %25 = vadd.xlane.f32.xlu0 %v24
  %v26 = vpop.xlane.xlu0 %25
  %v27 = vsel %vm23, %v22, 0.0
  %28 = vadd.xlane.f32.xlu0 %v27
  %v29 = vpop.xlane.xlu0 %28
  %v30 = vrcp.pop 32.0
  %v31 = vmul.f32 %v26, %v30
  %v32 = vmul.f32 %v29, %v30
  %v33 = vsub.f32 %v21, %v31
  %v34 = vsub.f32 %v22, %v32
  %v35 = vmul.f32 %v33, %v33
  %v36 = vmul.f32 %v34, %v34
  %v37 = vsel %vm23, %v35, 0.0
  %38 = vadd.xlane.f32.xlu0 %v37
  %v39 = vpop.xlane.xlu0 %38
  %v40 = vsel %vm23, %v36, 0.0
  %41 = vadd.xlane.f32.xlu0 %v40
  %v42 = vpop.xlane.xlu0 %41
  %v43 = vmul.f32 %v39, %v30
  %v44 = vmul.f32 %v42, %v30
  %v45 = vadd.f32 %v43, 1e-06
  %v46 = vadd.f32 %v44, 1e-06
  %v47 = vrsqrt.pop %v45
  %v48 = vrsqrt.pop %v46
  %v49 = vmul.f32 %v33, %v47
  %v50 = vmul.f32 %v34, %v48
  %v51 = vld [vmem:[%s1] sm:$0x1]
  %v53 = vlaneseq
  %v54 = vshrl.u32 %v53, 7
  %v55 = vsub.s32 0, %v54
  %v56 = vrot.slane %v51, %v55
  %v58 = vmul.f32 %v49, %v56
  %v59 = vmul.f32 %v50, %v56
  %v60 = vld [vmem:[%s2] sm:$0x1]
  %v62 = vlaneseq
  %v63 = vshrl.u32 %v62, 7
  %v64 = vsub.s32 0, %v63
  %v65 = vrot.slane %v60, %v64
  %v67 = vadd.f32 %v58, %v65
  %v68 = vadd.f32 %v59, %v65
  %v69 = vpack.c.bf16 %v68, %v67
  %v70 = vld [vmem:[%s3] sm:$0xf]
  %v71 = vld [vmem:[%s3 + $0x4] sm:$0xf]
  %v72 = vld [vmem:[%s3 + $0x8] sm:$0xf]
  %v73 = vld [vmem:[%s3 + $0xc] sm:$0xf]
  %v74 = vld [vmem:[%s4] sm:$0x1]
  %v76 = vlaneseq
  %v77 = vshrl.u32 %v76, 7
  %v78 = vsub.s32 0, %v77
  %v79 = vrot.slane %v74, %v78
  %v85 = vunpack.c.l.b16 %v70
  %v86 = vunpack.c.l.b16 %v71
  %v87 = vunpack.c.l.b16 %v72
  %v88 = vunpack.c.l.b16 %v73
  %v89 = vpack.c.b16 %v86, %v85
  %v90 = vpack.c.b16 %v88, %v87
  %v94 = vsel %vm23, %v69, 0
  %96 = vmatprep.subr.bf16.mxu0 0
  %97 = vmatpush1.bf16.msra.mxu0 %v89
  %98 = vmatprep.subr.bf16.mxu0 0
  %99 = vmatpush1.bf16.msra.mxu0 %v90
  %100 = vmatprep.subr.bf16.mxu0 0
  %101 = vmatpush1.bf16.msra.mxu0 0
  %102 = vmatprep.subr.bf16.mxu0 0
  %103 = vmatpush1.bf16.msra.mxu0 0
  %104 = vmatprep.subr.bf16.mxu0 0
  %105 = vmatpush1.bf16.msra.mxu0 0
  %106 = vmatprep.subr.bf16.mxu0 0
  %107 = vmatpush1.bf16.msra.mxu0 0
  %108 = vmatprep.subr.bf16.mxu0 0
  %109 = vmatpush1.bf16.msra.mxu0 0
  %110 = vmatprep.subr.bf16.mxu0 0
  %111 = vmatpush1.bf16.msra.mxu0 0
  %112 = vmatprep.subr.bf16.mxu0 0
  %113 = vmatpush1.bf16.msra.mxu0 0
  %114 = vmatprep.subr.bf16.mxu0 0
  %115 = vmatpush1.bf16.msra.mxu0 0
  %116 = vmatprep.subr.bf16.mxu0 0
  %117 = vmatpush1.bf16.msra.mxu0 0
  %118 = vmatprep.subr.bf16.mxu0 0
  %119 = vmatpush1.bf16.msra.mxu0 0
  %120 = vmatprep.subr.bf16.mxu0 0
  %121 = vmatpush1.bf16.msra.mxu0 0
  %122 = vmatprep.subr.bf16.mxu0 0
  %123 = vmatpush1.bf16.msra.mxu0 0
  %124 = vmatprep.subr.bf16.mxu0 0
  %125 = vmatpush1.bf16.msra.mxu0 0
  %126 = vmatprep.subr.bf16.mxu0 0
  %127 = vmatpush1.bf16.msra.mxu0 0
  %128 = vmatprep.mubr.bf16.mxu0 0
  %129 = vmatmul.mubr.bf16.gmra.mrb[0].mxu0 %v94
  %v130 = vpop.f32.mrb[0].mxu0
  %v131 = vadd.f32 %v79, %v130
  %v132 = vpop.f32.mrb[0].mxu0
  %v133 = vpop.f32.mrb[0].mxu0
  %v134 = vadd.f32 %v79, %v133
  %v135 = vpop.f32.mrb[0].mxu0
  %136 = vdwg.mxu0
  %v137 = vpack.c.bf16 %v134, %v131
  %v139 = vunpack.c.l.b16 %v137
  %v140 = vunpack.c.h.b16 %v137
  %v141 = vpack.c.b16 %v139, %v139
  %v142 = vpack.c.b16 %v140, %v140
  %vm145 = vcmask 781312
  %146 = vst.msk [vmem:[%s5] sm:$0xf] %vm145, %v141
  %147 = vst.msk [vmem:[%s5 + $0x4] sm:$0xf] %vm145, %v142
  // Predicated region
  $region22: #{block_forward.5} parent=0 // pred_check
    _
  $region23: #{block_forward.5} parent=0 // pred_check_branch
    %149 = sbr.rel (0) target = $region25
  $region24: #{block_forward.5} parent=0 // pred_region
    _
  $region25: #{block_forward.5} parent=0 // pred_fallthru
    _
  // Predicated region
  $region26: #{block_forward.5} parent=0 // pred_check
    _
  $region27: #{block_forward.5} parent=0 // pred_check_branch
    %151 = sbr.rel (0) target = $region29
  $region28: #{block_forward.5} parent=0 // pred_region
    _
  $region29: #{block_forward.5} parent=0 // pred_fallthru
    _

// kernel: block_forward.7
$region0: #{block_forward.7}
  #allocation0 [shape = 'u32[]', space=smem, size = 0x4, offset = 0x4, fixed_abs, tag = 'smem constant byte address 0x4 - core index']
  #allocation1 [shape = 'u32[144,128]{1,0:T(1,128)}', space=vmem, size = 0x12000, scoped, tag = 'internal scratch']
  %s0 = inlined_call_operand.vmem [shape: bf16[16,32], index: 0, kind: input, shape index: {}]
  %s1 = inlined_call_operand.vmem [shape: bf16[32,32], index: 1, kind: input, shape index: {}]
  %s2 = inlined_call_operand.vmem [shape: f32[1,32], index: 2, kind: input, shape index: {}]
  %s3 = inlined_call_operand.vmem [shape: f32[16,32], index: 3, kind: input, shape index: {}]
  %s4 = inlined_call_operand.vmem [shape: f32[16,32], index: 4, kind: output, shape index: {}]
  %s5 = sld [smem:[#allocation0]]
  $region26: #{block_forward.7} parent=0
    _
  %s7 = ssub.s32 1, %s5
  %s8 = scalar_select 0, %s7, %s5
  // Predicated region
  $region2: #{block_forward.7} parent=0 // pred_check
    _
  $region3: #{block_forward.7} parent=0 // pred_check_branch
    %10 = sbr.rel (0) target = $region5
  $region4: #{block_forward.7} parent=0 // pred_region
    _
  $region5: #{block_forward.7} parent=0 // pred_fallthru
    _
  // Predicated region
  $region6: #{block_forward.7} parent=0 // pred_check
    _
  $region7: #{block_forward.7} parent=0 // pred_check_branch
    %12 = sbr.rel (0) target = $region9
  $region8: #{block_forward.7} parent=0 // pred_region
    _
  $region9: #{block_forward.7} parent=0 // pred_fallthru
    _
  // Predicated region
  $region10: #{block_forward.7} parent=0 // pred_check
    _
  $region11: #{block_forward.7} parent=0 // pred_check_branch
    %14 = sbr.rel (0) target = $region13
  $region12: #{block_forward.7} parent=0 // pred_region
    _
  $region13: #{block_forward.7} parent=0 // pred_fallthru
    _
  // Predicated region
  $region14: #{block_forward.7} parent=0 // pred_check
    _
  $region15: #{block_forward.7} parent=0 // pred_check_branch
    %16 = sbr.rel (0) target = $region17
  $region16: #{block_forward.7} parent=0 // pred_region
    _
  $region17: #{block_forward.7} parent=0 // pred_fallthru
    _
  %v18 = vld [vmem:[%s0] sm:$0xf]
  %v19 = vld [vmem:[%s0 + $0x4] sm:$0xf]
  %v20 = vld [vmem:[%s1] sm:$0xf]
  %v21 = vld [vmem:[%s1 + $0x4] sm:$0xf]
  %v22 = vld [vmem:[%s1 + $0x8] sm:$0xf]
  %v23 = vld [vmem:[%s1 + $0xc] sm:$0xf]
  %v24 = vld [vmem:[%s2] sm:$0x1]
  %v26 = vlaneseq
  %v27 = vshrl.u32 %v26, 7
  %v28 = vsub.s32 0, %v27
  %v29 = vrot.slane %v24, %v28
  %v33 = vunpack.c.l.b16 %v18
  %v34 = vunpack.c.l.b16 %v19
  %v35 = vpack.c.b16 %v34, %v33
  %v40 = vunpack.c.l.b16 %v20
  %v41 = vunpack.c.l.b16 %v21
  %v42 = vunpack.c.l.b16 %v22
  %v43 = vunpack.c.l.b16 %v23
  %v44 = vpack.c.b16 %v41, %v40
  %v45 = vpack.c.b16 %v43, %v42
  %vm48 = vcmask 261120
  %v50 = vsel %vm48, %v35, 0
  %52 = vmatprep.subr.bf16.mxu0 0
  %53 = vmatpush1.bf16.msra.mxu0 %v44
  %54 = vmatprep.subr.bf16.mxu0 0
  %55 = vmatpush1.bf16.msra.mxu0 %v45
  %56 = vmatprep.subr.bf16.mxu0 0
  %57 = vmatpush1.bf16.msra.mxu0 0
  %58 = vmatprep.subr.bf16.mxu0 0
  %59 = vmatpush1.bf16.msra.mxu0 0
  %60 = vmatprep.subr.bf16.mxu0 0
  %61 = vmatpush1.bf16.msra.mxu0 0
  %62 = vmatprep.subr.bf16.mxu0 0
  %63 = vmatpush1.bf16.msra.mxu0 0
  %64 = vmatprep.subr.bf16.mxu0 0
  %65 = vmatpush1.bf16.msra.mxu0 0
  %66 = vmatprep.subr.bf16.mxu0 0
  %67 = vmatpush1.bf16.msra.mxu0 0
  %68 = vmatprep.subr.bf16.mxu0 0
  %69 = vmatpush1.bf16.msra.mxu0 0
  %70 = vmatprep.subr.bf16.mxu0 0
  %71 = vmatpush1.bf16.msra.mxu0 0
  %72 = vmatprep.subr.bf16.mxu0 0
  %73 = vmatpush1.bf16.msra.mxu0 0
  %74 = vmatprep.subr.bf16.mxu0 0
  %75 = vmatpush1.bf16.msra.mxu0 0
  %76 = vmatprep.subr.bf16.mxu0 0
  %77 = vmatpush1.bf16.msra.mxu0 0
  %78 = vmatprep.subr.bf16.mxu0 0
  %79 = vmatpush1.bf16.msra.mxu0 0
  %80 = vmatprep.subr.bf16.mxu0 0
  %81 = vmatpush1.bf16.msra.mxu0 0
  %82 = vmatprep.subr.bf16.mxu0 0
  %83 = vmatpush1.bf16.msra.mxu0 0
  %84 = vmatprep.mubr.bf16.mxu0 0
  %85 = vmatmul.mubr.bf16.gmra.mrb[0].mxu0 %v50
  %v86 = vpop.f32.mrb[0].mxu0
  %v87 = vadd.f32 %v29, %v86
  %v88 = vpop.f32.mrb[0].mxu0
  %v89 = vpop.f32.mrb[0].mxu0
  %v90 = vadd.f32 %v29, %v89
  %v91 = vpop.f32.mrb[0].mxu0
  %92 = vdwg.mxu0
  %v93 = vld [vmem:[%s3] sm:$0xff]
  %v94 = vld [vmem:[%s3 + $0x8] sm:$0xff]
  %v95 = vadd.f32 %v87, %v93
  %v96 = vadd.f32 %v90, %v94
  %97 = vst.msk [vmem:[%s4] sm:$0xff] %vm48, %v95
  %98 = vst.msk [vmem:[%s4 + $0x8] sm:$0xff] %vm48, %v96
  // Predicated region
  $region18: #{block_forward.7} parent=0 // pred_check
    _
  $region19: #{block_forward.7} parent=0 // pred_check_branch
    %100 = sbr.rel (0) target = $region21
  $region20: #{block_forward.7} parent=0 // pred_region
    _
  $region21: #{block_forward.7} parent=0 // pred_fallthru
    _
  // Predicated region
  $region22: #{block_forward.7} parent=0 // pred_check
    _
  $region23: #{block_forward.7} parent=0 // pred_check_branch
    %102 = sbr.rel (0) target = $region25
  $region24: #{block_forward.7} parent=0 // pred_region
    _
  $region25: #{block_forward.7} parent=0 // pred_fallthru
    _

// kernel: block_forward.8
$region0: #{block_forward.8}
  #allocation0 [shape = 'u32[]', space=smem, size = 0x4, offset = 0x4, fixed_abs, tag = 'smem constant byte address 0x4 - core index']
  #allocation1 [shape = 'u32[144,128]{1,0:T(1,128)}', space=vmem, size = 0x12000, scoped, tag = 'internal scratch']
  %s0 = inlined_call_operand.vmem [shape: f32[16,32], index: 0, kind: input, shape index: {}]
  %s1 = inlined_call_operand.vmem [shape: f32[1,32], index: 1, kind: input, shape index: {}]
  %s2 = inlined_call_operand.vmem [shape: f32[1,32], index: 2, kind: input, shape index: {}]
  %s3 = inlined_call_operand.vmem [shape: bf16[32,128], index: 3, kind: input, shape index: {}]
  %s4 = inlined_call_operand.vmem [shape: f32[1,128], index: 4, kind: input, shape index: {}]
  %s5 = inlined_call_operand.vmem [shape: bf16[16,128], index: 5, kind: output, shape index: {}]
  %s6 = sld [smem:[#allocation0]]
  $region30: #{block_forward.8} parent=0
    _
  %s8 = ssub.s32 1, %s6
  %s9 = scalar_select 0, %s8, %s6
  // Predicated region
  $region2: #{block_forward.8} parent=0 // pred_check
    _
  $region3: #{block_forward.8} parent=0 // pred_check_branch
    %11 = sbr.rel (0) target = $region5
  $region4: #{block_forward.8} parent=0 // pred_region
    _
  $region5: #{block_forward.8} parent=0 // pred_fallthru
    _
  // Predicated region
  $region6: #{block_forward.8} parent=0 // pred_check
    _
  $region7: #{block_forward.8} parent=0 // pred_check_branch
    %13 = sbr.rel (0) target = $region9
  $region8: #{block_forward.8} parent=0 // pred_region
    _
  $region9: #{block_forward.8} parent=0 // pred_fallthru
    _
  // Predicated region
  $region10: #{block_forward.8} parent=0 // pred_check
    _
  $region11: #{block_forward.8} parent=0 // pred_check_branch
    %15 = sbr.rel (0) target = $region13
  $region12: #{block_forward.8} parent=0 // pred_region
    _
  $region13: #{block_forward.8} parent=0 // pred_fallthru
    _
  // Predicated region
  $region14: #{block_forward.8} parent=0 // pred_check
    _
  $region15: #{block_forward.8} parent=0 // pred_check_branch
    %17 = sbr.rel (0) target = $region17
  $region16: #{block_forward.8} parent=0 // pred_region
    _
  $region17: #{block_forward.8} parent=0 // pred_fallthru
    _
  // Predicated region
  $region18: #{block_forward.8} parent=0 // pred_check
    _
  $region19: #{block_forward.8} parent=0 // pred_check_branch
    %19 = sbr.rel (0) target = $region21
  $region20: #{block_forward.8} parent=0 // pred_region
    _
  $region21: #{block_forward.8} parent=0 // pred_fallthru
    _
  %v21 = vld [vmem:[%s0] sm:$0xff]
  %v22 = vld [vmem:[%s0 + $0x8] sm:$0xff]
  %vm23 = vcmask 261120
  %v24 = vsel %vm23, %v21, 0.0
  %25 = vadd.xlane.f32.xlu0 %v24
  %v26 = vpop.xlane.xlu0 %25
  %v27 = vsel %vm23, %v22, 0.0
  %28 = vadd.xlane.f32.xlu0 %v27
  %v29 = vpop.xlane.xlu0 %28
  %v30 = vrcp.pop 32.0
  %v31 = vmul.f32 %v26, %v30
  %v32 = vmul.f32 %v29, %v30
  %v33 = vsub.f32 %v21, %v31
  %v34 = vsub.f32 %v22, %v32
  %v35 = vmul.f32 %v33, %v33
  %v36 = vmul.f32 %v34, %v34
  %v37 = vsel %vm23, %v35, 0.0
  %38 = vadd.xlane.f32.xlu0 %v37
  %v39 = vpop.xlane.xlu0 %38
  %v40 = vsel %vm23, %v36, 0.0
  %41 = vadd.xlane.f32.xlu0 %v40
  %v42 = vpop.xlane.xlu0 %41
  %v43 = vmul.f32 %v39, %v30
  %v44 = vmul.f32 %v42, %v30
  %v45 = vadd.f32 %v43, 1e-06
  %v46 = vadd.f32 %v44, 1e-06
  %v47 = vrsqrt.pop %v45
  %v48 = vrsqrt.pop %v46
  %v49 = vmul.f32 %v33, %v47
  %v50 = vmul.f32 %v34, %v48
  %v51 = vld [vmem:[%s1] sm:$0x1]
  %v53 = vlaneseq
  %v54 = vshrl.u32 %v53, 7
  %v55 = vsub.s32 0, %v54
  %v56 = vrot.slane %v51, %v55
  %v58 = vmul.f32 %v49, %v56
  %v59 = vmul.f32 %v50, %v56
  %v60 = vld [vmem:[%s2] sm:$0x1]
  %v62 = vlaneseq
  %v63 = vshrl.u32 %v62, 7
  %v64 = vsub.s32 0, %v63
  %v65 = vrot.slane %v60, %v64
  %v67 = vadd.f32 %v58, %v65
  %v68 = vadd.f32 %v59, %v65
  %v69 = vpack.c.bf16 %v68, %v67
  %v70 = vld [vmem:[%s3] sm:$0xf]
  %v71 = vld [vmem:[%s3 + $0x4] sm:$0xf]
  %v72 = vld [vmem:[%s3 + $0x8] sm:$0xf]
  %v73 = vld [vmem:[%s3 + $0xc] sm:$0xf]
  %v74 = vld [vmem:[%s4] sm:$0x1]
  %v76 = vlaneseq
  %v77 = vshrl.u32 %v76, 7
  %v78 = vsub.s32 0, %v77
  %v79 = vrot.slane %v74, %v78
  %v85 = vunpack.c.l.b16 %v70
  %v86 = vunpack.c.l.b16 %v71
  %v87 = vunpack.c.l.b16 %v72
  %v88 = vunpack.c.l.b16 %v73
  %v89 = vpack.c.b16 %v86, %v85
  %v90 = vpack.c.b16 %v88, %v87
  %v94 = vsel %vm23, %v69, 0
  %96 = vmatprep.subr.bf16.mxu0 0
  %97 = vmatpush1.bf16.msra.mxu0 %v89
  %98 = vmatprep.subr.bf16.mxu0 0
  %99 = vmatpush1.bf16.msra.mxu0 %v90
  %100 = vmatprep.subr.bf16.mxu0 0
  %101 = vmatpush1.bf16.msra.mxu0 0
  %102 = vmatprep.subr.bf16.mxu0 0
  %103 = vmatpush1.bf16.msra.mxu0 0
  %104 = vmatprep.subr.bf16.mxu0 0
  %105 = vmatpush1.bf16.msra.mxu0 0
  %106 = vmatprep.subr.bf16.mxu0 0
  %107 = vmatpush1.bf16.msra.mxu0 0
  %108 = vmatprep.subr.bf16.mxu0 0
  %109 = vmatpush1.bf16.msra.mxu0 0
  %110 = vmatprep.subr.bf16.mxu0 0
  %111 = vmatpush1.bf16.msra.mxu0 0
  %112 = vmatprep.subr.bf16.mxu0 0
  %113 = vmatpush1.bf16.msra.mxu0 0
  %114 = vmatprep.subr.bf16.mxu0 0
  %115 = vmatpush1.bf16.msra.mxu0 0
  %116 = vmatprep.subr.bf16.mxu0 0
  %117 = vmatpush1.bf16.msra.mxu0 0
  %118 = vmatprep.subr.bf16.mxu0 0
  %119 = vmatpush1.bf16.msra.mxu0 0
  %120 = vmatprep.subr.bf16.mxu0 0
  %121 = vmatpush1.bf16.msra.mxu0 0
  %122 = vmatprep.subr.bf16.mxu0 0
  %123 = vmatpush1.bf16.msra.mxu0 0
  %124 = vmatprep.subr.bf16.mxu0 0
  %125 = vmatpush1.bf16.msra.mxu0 0
  %126 = vmatprep.subr.bf16.mxu0 0
  %127 = vmatpush1.bf16.msra.mxu0 0
  %128 = vmatprep.mubr.bf16.mxu0 0
  %129 = vmatmul.mubr.bf16.gmra.mrb[0].mxu0 %v94
  %v130 = vpop.f32.mrb[0].mxu0
  %v131 = vadd.f32 %v79, %v130
  %v132 = vpop.f32.mrb[0].mxu0
  %v133 = vpop.f32.mrb[0].mxu0
  %v134 = vadd.f32 %v79, %v133
  %v135 = vpop.f32.mrb[0].mxu0
  %136 = vdwg.mxu0
  %v137 = vmul.f32 %v131, 0.5
  %v138 = vmul.f32 %v134, 0.5
  %v139 = vmul.f32 %v131, 0.044715
  %v140 = vmul.f32 %v134, 0.044715
  %v141 = vmul.f32 %v139, %v131
  %v142 = vmul.f32 %v140, %v134
  %v143 = vmul.f32 %v141, %v131
  %v144 = vmul.f32 %v142, %v134
  %v145 = vadd.f32 %v131, %v143
  %v146 = vadd.f32 %v134, %v144
  %v147 = vmul.f32 %v145, 0.7978846
  %v148 = vmul.f32 %v146, 0.7978846
  %v149 = vtanh.pop %v147
  %v150 = vtanh.pop %v148
  %v151 = vadd.f32 %v149, 1.0
  %v152 = vadd.f32 %v150, 1.0
  %v153 = vmul.f32 %v137, %v151
  %v154 = vmul.f32 %v138, %v152
  %v155 = vpack.c.bf16 %v154, %v153
  %v157 = vunpack.c.l.b16 %v155
  %v158 = vunpack.c.h.b16 %v155
  %v159 = vpack.c.b16 %v157, %v157
  %v160 = vpack.c.b16 %v158, %v158
  %163 = vst [vmem:[%s5] sm:$0xf] %v159
  %164 = vst [vmem:[%s5 + $0x4] sm:$0xf] %v160
  // Predicated region
  $region22: #{block_forward.8} parent=0 // pred_check
    _
  $region23: #{block_forward.8} parent=0 // pred_check_branch
    %166 = sbr.rel (0) target = $region25
  $region24: #{block_forward.8} parent=0 // pred_region
    _
  $region25: #{block_forward.8} parent=0 // pred_fallthru
    _
  // Predicated region
  $region26: #{block_forward.8} parent=0 // pred_check
    _
  $region27: #{block_forward.8} parent=0 // pred_check_branch
    %168 = sbr.rel (0) target = $region29
  $region28: #{block_forward.8} parent=0 // pred_region
    _
  $region29: #{block_forward.8} parent=0 // pred_fallthru
    _

// kernel: block_forward.6
$region0: #{block_forward.6}
  #allocation0 [shape = 'u32[]', space=smem, size = 0x4, offset = 0x4, fixed_abs, tag = 'smem constant byte address 0x4 - core index']
  #allocation1 [shape = 'u32[144,128]{1,0:T(1,128)}', space=vmem, size = 0x12000, scoped, tag = 'internal scratch']
  %s0 = inlined_call_operand.vmem [shape: bf16[2,8,96], index: 0, kind: input, shape index: {}, may-alias: {0,1}]
  %s1 = inlined_call_operand.vmem [shape: bf16[2,8,96], index: 1, kind: input, shape index: {}, may-alias: {0,1}]
  %s2 = inlined_call_operand.vmem [shape: bf16[2,8,32], index: 2, kind: output, shape index: {}]
  %s3 = sld [smem:[#allocation0]]
  $region41: #{block_forward.6} parent=0
    _
  %s5 = ssub.s32 1, %s3
  %s6 = scalar_select 0, %s5, %s3
  loop: start=0, step=1, limit=4
  $region2: #{block_forward.6} parent=0 // loop_pre_header
    _
  $region3: #{block_forward.6} parent=0 // loop_header
    %s8 = sphi 0, %s12
    %p9 = scmp.ge.s32.totalorder %s8, 4
    %s15 = sphi 0, %s27
    %s16 = sphi 0, %s23
    %s17 = sphi 0, %s15
    %s18 = sphi 0, %s16
    %s19 = sphi 0, %s17
    %s20 = sphi 0, %s18
    %s32 = sphi 0, %s34
    %s35 = sphi 0, %s32
    %s36 = sphi 0, %s35
    %s52 = sphi 0, %s36
    %s58 = sphi 0, %s60
    %s61 = sphi 0, %s58
    %s62 = sphi 0, %s61
    %s78 = sphi 0, %s62
    %s86 = sphi 0, %s88
    %s89 = sphi 0, %s86
    %s90 = sphi 0, %s89
    %s106 = sphi 0, %s90
  $region4: #{block_forward.6} parent=0 // loop_header_branch
    %11 = sbr.rel (%p9) target = $region8
  $region5: #{block_forward.6} parent=0 // loop_body
    %s13 = ssub.s32 %s8, 1
    %s14 = ssub.s32 %s8, 2
    %s21 = sadd.s32 1, %s16
    %p22 = scmp.ge.s32.totalorder %s21, 1
    %s23 = scalar_select %p22, 0, %s21
    %s24 = sadd.s32 1, %s15
    %s25 = scalar_select %p22, %s24, %s15
    %p26 = scmp.ge.s32.totalorder %s25, 2
    %s27 = scalar_select %p26, 0, %s25
    %s28 = ssub.s32 %s15, %s27
    %s29 = ssub.s32 %s16, %s23
    %s30 = sor.u32 %s28, %s29
    %p31 = scmp.eq.s32.totalorder %s30, 0
    %s33 = sadd.s32 %s32, 1
    %s34 = scalar_select %p31, %s32, %s33
    %p37 = pneg %p31
    %p38 = scmp.eq.s32.totalorder %s8, 1
    %p39 = por %p37, %p38
    %p40 = scmp.ne.s32.totalorder %s32, %s35
    %p41 = scmp.eq.s32.totalorder %s8, 0
    %p42 = por %p40, %p41
    %p43 = scmp.ne.s32.totalorder %s32, %s35
    %p44 = scmp.eq.s32.totalorder %s13, 1
    %p45 = por %p43, %p44
    %p46 = scmp.ne.s32.totalorder %s35, %s36
    %p47 = scmp.eq.s32.totalorder %s13, 0
    %p48 = por %p46, %p47
    %p49 = scmp.ne.s32.totalorder %s35, %s36
    %p50 = scmp.eq.s32.totalorder %s14, 1
    %p51 = por %p49, %p50
    %p53 = scmp.ne.s32.totalorder %s36, %s52
    %p54 = scmp.eq.s32.totalorder %s14, 0
    %p55 = por %p53, %p54
    %s56 = ssub.s32 %s15, %s27
    %p57 = scmp.eq.s32.totalorder %s56, 0
    %s59 = sadd.s32 %s58, 1
    %s60 = scalar_select %p57, %s58, %s59
    %p63 = pneg %p57
    %p64 = scmp.eq.s32.totalorder %s8, 1
    %p65 = por %p63, %p64
    %p66 = scmp.ne.s32.totalorder %s58, %s61
    %p67 = scmp.eq.s32.totalorder %s8, 0
    %p68 = por %p66, %p67
    %p69 = scmp.ne.s32.totalorder %s58, %s61
    %p70 = scmp.eq.s32.totalorder %s13, 1
    %p71 = por %p69, %p70
    %p72 = scmp.ne.s32.totalorder %s61, %s62
    %p73 = scmp.eq.s32.totalorder %s13, 0
    %p74 = por %p72, %p73
    %p75 = scmp.ne.s32.totalorder %s61, %s62
    %p76 = scmp.eq.s32.totalorder %s14, 1
    %p77 = por %p75, %p76
    %p79 = scmp.ne.s32.totalorder %s62, %s78
    %p80 = scmp.eq.s32.totalorder %s14, 0
    %p81 = por %p79, %p80
    %s82 = ssub.s32 %s15, %s27
    %s83 = ssub.s32 %s16, %s23
    %s84 = sor.u32 %s82, %s83
    %p85 = scmp.eq.s32.totalorder %s84, 0
    %s87 = sadd.s32 %s86, 1
    %s88 = scalar_select %p85, %s86, %s87
    %p91 = pneg %p85
    %p92 = scmp.eq.s32.totalorder %s8, 1
    %p93 = por %p91, %p92
    %p94 = scmp.ne.s32.totalorder %s86, %s89
    %p95 = scmp.eq.s32.totalorder %s8, 0
    %p96 = por %p94, %p95
    %p97 = scmp.ne.s32.totalorder %s86, %s89
    %p98 = scmp.eq.s32.totalorder %s13, 1
    %p99 = por %p97, %p98
    %p100 = scmp.ne.s32.totalorder %s89, %s90
    %p101 = scmp.eq.s32.totalorder %s13, 0
    %p102 = por %p100, %p101
    %p103 = scmp.ne.s32.totalorder %s89, %s90
    %p104 = scmp.eq.s32.totalorder %s14, 1
    %p105 = por %p103, %p104
    %p107 = scmp.ne.s32.totalorder %s90, %s106
    %p108 = scmp.eq.s32.totalorder %s14, 0
    %p109 = por %p107, %p108
    %p110 = scmp.le.s32.totalorder 1, %s8
    %p111 = scmp.lt.s32.totalorder %s8, 3
    %p112 = pnand %p110, %p111
    %p113 = pneg %p112
    // Predicated region
    $region9: #{block_forward.6} parent=5 // pred_check
      _
    $region10: #{block_forward.6} parent=5 // pred_check_branch
      %115 = sbr.rel (%p112) target = $region12
    $region11: #{block_forward.6} parent=5 // pred_region
      %s116 = ssub.s32 %s8, 1
    $region12: #{block_forward.6} parent=5 // pred_fallthru
      _
    %p117 = scmp.lt.s32.totalorder %s8, 2
    // Predicated region
    $region13: #{block_forward.6} parent=5 // pred_check
      %p118 = pneg %p117
    $region14: #{block_forward.6} parent=5 // pred_check_branch
      %120 = sbr.rel (%p118) target = $region16
    $region15: #{block_forward.6} parent=5 // pred_region
      // Predicated region
      $region17: #{block_forward.6} parent=15 // pred_check
        %p121 = pneg %p42
      $region18: #{block_forward.6} parent=15 // pred_check_branch
        %123 = sbr.rel (%p121) target = $region20
      $region19: #{block_forward.6} parent=15 // pred_region
        %p124 = scmp.lt.s32.totalorder %s15, 1
        %s125 = scalar_select %p124, %s15, 1
        %p126 = scmp.lt.s32.totalorder %s16, 0
        %s127 = scalar_select %p126, %s16, 0
        %s128 = sadd.s32 %s127, %s125
        %s129 = smul.addr %s128, 4
        %s130 = scalar_lea.vmem %s0, %s129
      $region20: #{block_forward.6} parent=15 // pred_fallthru
        _
      // Predicated region
      $region21: #{block_forward.6} parent=15 // pred_check
        %p131 = pneg %p68
      $region22: #{block_forward.6} parent=15 // pred_check_branch
        %133 = sbr.rel (%p131) target = $region24
      $region23: #{block_forward.6} parent=15 // pred_region
        %p134 = scmp.lt.s32.totalorder %s15, 1
        %s135 = scalar_select %p134, %s15, 1
        %s136 = smul.addr %s135, 4
        %s137 = scalar_lea.vmem %s1, %s136
      $region24: #{block_forward.6} parent=15 // pred_fallthru
        _
    $region16: #{block_forward.6} parent=5 // pred_fallthru
      _
    %p138 = scmp.le.s32.totalorder 1, %s8
    %p139 = scmp.lt.s32.totalorder %s8, 3
    %p140 = pnand %p138, %p139
    %p141 = pneg %p140
    // Predicated region
    $region25: #{block_forward.6} parent=5 // pred_check
      _
    $region26: #{block_forward.6} parent=5 // pred_check_branch
      %143 = sbr.rel (%p140) target = $region28
    $region27: #{block_forward.6} parent=5 // pred_region
      %s144 = ssub.s32 %s8, 1
      %p145 = scmp.lt.s32.totalorder %s17, 1
      %s146 = scalar_select %p145, %s17, 1
      %p147 = scmp.lt.s32.totalorder %s18, 0
      %s148 = scalar_select %p147, %s18, 0
      %s149 = sadd.s32 %s148, %s146
      %s150 = smul.addr %s149, 4
      %s151 = scalar_lea.vmem %s0, %s150
      %p152 = pneg %p48
      %p153 = pneg %p45
      %p154 = scmp.lt.s32.totalorder %s17, 1
      %s155 = scalar_select %p154, %s17, 1
      %s156 = smul.addr %s155, 4
      %s157 = scalar_lea.vmem %s1, %s156
      %p158 = pneg %p74
      %p159 = pneg %p71
      %p160 = pneg %p102
      %p161 = pneg %p99
      %p162 = scmp.lt.s32.totalorder %s17, 1
      %s163 = scalar_select %p162, %s17, 1
      %p164 = scmp.lt.s32.totalorder %s18, 0
      %s165 = scalar_select %p164, %s18, 0
      %s166 = sadd.s32 %s165, %s163
      %s167 = smul.addr %s166, 4
      %s168 = scalar_lea.vmem %s2, %s167
      %p169 = scmp.lt.s32.totalorder %s17, 1
      %s170 = scalar_select %p169, %s17, 1
      %p171 = scmp.lt.s32.totalorder %s18, 0
      %s172 = scalar_select %p171, %s18, 0
      %s173 = sadd.s32 %s172, %s170
      %s174 = smul.addr %s173, 4
      %s175 = scalar_lea.vmem %s0, %s174
      %p176 = scmp.lt.s32.totalorder %s17, 1
      %s177 = scalar_select %p176, %s17, 1
      %s178 = smul.addr %s177, 4
      %s179 = scalar_lea.vmem %s1, %s178
      %p180 = scmp.lt.s32.totalorder %s17, 1
      %s181 = scalar_select %p180, %s17, 1
      %p182 = scmp.lt.s32.totalorder %s18, 0
      %s183 = scalar_select %p182, %s18, 0
      %s184 = sadd.s32 %s183, %s181
      %s185 = smul.addr %s184, 4
      %s186 = scalar_lea.vmem %s2, %s185
      %v188 = vld [vmem:[%s175] sm:$0xf]
      %v189 = vld [vmem:[%s179] sm:$0xf]
      %v191 = vunpack.c.l.b16 %v189
      %v192 = vpack.c.b16 %v191, %v191
      %193 = vrot.lane.b32.xlu0 %v192, 96
      %v194 = vpop.permute.xlu0 %193
      %vm195 = vcmask 64512
      %v197 = vsel %vm195, %v188, 0
      %v200 = vsel %vm195, %v194, 0
      %202 = vmatprep.subr.bf16.mxu0 0
      %203 = vmatpush1.bf16.xpose.msra.mxu0 %v200
      %204 = vmatprep.subr.bf16.mxu0 0
      %205 = vmatpush1.bf16.xpose.msra.mxu0 0
      %206 = vmatprep.subr.bf16.mxu0 0
      %207 = vmatpush1.bf16.xpose.msra.mxu0 0
      %208 = vmatprep.subr.bf16.mxu0 0
      %209 = vmatpush1.bf16.xpose.msra.mxu0 0
      %210 = vmatprep.subr.bf16.mxu0 0
      %211 = vmatpush1.bf16.xpose.msra.mxu0 0
      %212 = vmatprep.subr.bf16.mxu0 0
      %213 = vmatpush1.bf16.xpose.msra.mxu0 0
      %214 = vmatprep.subr.bf16.mxu0 0
      %215 = vmatpush1.bf16.xpose.msra.mxu0 0
      %216 = vmatprep.subr.bf16.mxu0 0
      %217 = vmatpush1.bf16.xpose.msra.mxu0 0
      %218 = vmatprep.subr.bf16.mxu0 0
      %219 = vmatpush1.bf16.xpose.msra.mxu0 0
      %220 = vmatprep.subr.bf16.mxu0 0
      %221 = vmatpush1.bf16.xpose.msra.mxu0 0
      %222 = vmatprep.subr.bf16.mxu0 0
      %223 = vmatpush1.bf16.xpose.msra.mxu0 0
      %224 = vmatprep.subr.bf16.mxu0 0
      %225 = vmatpush1.bf16.xpose.msra.mxu0 0
      %226 = vmatprep.subr.bf16.mxu0 0
      %227 = vmatpush1.bf16.xpose.msra.mxu0 0
      %228 = vmatprep.subr.bf16.mxu0 0
      %229 = vmatpush1.bf16.xpose.msra.mxu0 0
      %230 = vmatprep.subr.bf16.mxu0 0
      %231 = vmatpush1.bf16.xpose.msra.mxu0 0
      %232 = vmatprep.subr.bf16.mxu0 0
      %233 = vmatpush1.bf16.xpose.msra.mxu0 0
      %234 = vmatprep.mubr.bf16.mxu0 0
      %235 = vmatmul.mubr.bf16.gmra.mrb[0].mxu0 %v197
      %v236 = vpop.f32.mrb[0].mxu0
      %v237 = vadd.f32 0.0, %v236
      %v238 = vpop.f32.mrb[0].mxu0
      %v239 = vpop.f32.mrb[0].mxu0
      %v240 = vpop.f32.mrb[0].mxu0
      %241 = vdwg.mxu0
      %v242 = vmul.f32 %v237, 0.35355338
      %v244 = vunpack.c.l.b16 %v188
      %v245 = vpack.c.b16 %v244, %v244
      %246 = vrot.lane.b32.xlu0 %v245, 120
      %v247 = vpop.permute.xlu0 %246
      %248 = vrot.lane.b32.xlu0 %v192, 88
      %v249 = vpop.permute.xlu0 %248
      %v251 = vsel %vm195, %v247, 0
      %v254 = vsel %vm195, %v249, 0
      %256 = vmatprep.subr.bf16.mxu0 0
      %257 = vmatpush1.bf16.xpose.msra.mxu0 %v254
      %258 = vmatprep.subr.bf16.mxu0 0
      %259 = vmatpush1.bf16.xpose.msra.mxu0 0
      %260 = vmatprep.subr.bf16.mxu0 0
      %261 = vmatpush1.bf16.xpose.msra.mxu0 0
      %262 = vmatprep.subr.bf16.mxu0 0
      %263 = vmatpush1.bf16.xpose.msra.mxu0 0
      %264 = vmatprep.subr.bf16.mxu0 0
      %265 = vmatpush1.bf16.xpose.msra.mxu0 0
      %266 = vmatprep.subr.bf16.mxu0 0
      %267 = vmatpush1.bf16.xpose.msra.mxu0 0
      %268 = vmatprep.subr.bf16.mxu0 0
      %269 = vmatpush1.bf16.xpose.msra.mxu0 0
      %270 = vmatprep.subr.bf16.mxu0 0
      %271 = vmatpush1.bf16.xpose.msra.mxu0 0
      %272 = vmatprep.subr.bf16.mxu0 0
      %273 = vmatpush1.bf16.xpose.msra.mxu0 0
      %274 = vmatprep.subr.bf16.mxu0 0
      %275 = vmatpush1.bf16.xpose.msra.mxu0 0
      %276 = vmatprep.subr.bf16.mxu0 0
      %277 = vmatpush1.bf16.xpose.msra.mxu0 0
      %278 = vmatprep.subr.bf16.mxu0 0
      %279 = vmatpush1.bf16.xpose.msra.mxu0 0
      %280 = vmatprep.subr.bf16.mxu0 0
      %281 = vmatpush1.bf16.xpose.msra.mxu0 0
      %282 = vmatprep.subr.bf16.mxu0 0
      %283 = vmatpush1.bf16.xpose.msra.mxu0 0
      %284 = vmatprep.subr.bf16.mxu0 0
      %285 = vmatpush1.bf16.xpose.msra.mxu0 0
      %286 = vmatprep.subr.bf16.mxu0 0
      %287 = vmatpush1.bf16.xpose.msra.mxu0 0
      %288 = vmatprep.mubr.bf16.mxu0 0
      %289 = vmatmul.mubr.bf16.gmra.mrb[0].mxu0 %v251
      %v290 = vpop.f32.mrb[0].mxu0
      %v291 = vadd.f32 0.0, %v290
      %v292 = vpop.f32.mrb[0].mxu0
      %v293 = vpop.f32.mrb[0].mxu0
      %v294 = vpop.f32.mrb[0].mxu0
      %295 = vdwg.mxu0
      %v296 = vmul.f32 %v291, 0.35355338
      %297 = vrot.lane.b32.xlu0 %v245, 112
      %v298 = vpop.permute.xlu0 %297
      %299 = vrot.lane.b32.xlu0 %v192, 80
      %v300 = vpop.permute.xlu0 %299
      %v302 = vsel %vm195, %v298, 0
      %v305 = vsel %vm195, %v300, 0
      %307 = vmatprep.subr.bf16.mxu0 0
      %308 = vmatpush1.bf16.xpose.msra.mxu0 %v305
      %309 = vmatprep.subr.bf16.mxu0 0
      %310 = vmatpush1.bf16.xpose.msra.mxu0 0
      %311 = vmatprep.subr.bf16.mxu0 0
      %312 = vmatpush1.bf16.xpose.msra.mxu0 0
      %313 = vmatprep.subr.bf16.mxu0 0
      %314 = vmatpush1.bf16.xpose.msra.mxu0 0
      %315 = vmatprep.subr.bf16.mxu0 0
      %316 = vmatpush1.bf16.xpose.msra.mxu0 0
      %317 = vmatprep.subr.bf16.mxu0 0
      %318 = vmatpush1.bf16.xpose.msra.mxu0 0
      %319 = vmatprep.subr.bf16.mxu0 0
      %320 = vmatpush1.bf16.xpose.msra.mxu0 0
      %321 = vmatprep.subr.bf16.mxu0 0
      %322 = vmatpush1.bf16.xpose.msra.mxu0 0
      %323 = vmatprep.subr.bf16.mxu0 0
      %324 = vmatpush1.bf16.xpose.msra.mxu0 0
      %325 = vmatprep.subr.bf16.mxu0 0
      %326 = vmatpush1.bf16.xpose.msra.mxu0 0
      %327 = vmatprep.subr.bf16.mxu0 0
      %328 = vmatpush1.bf16.xpose.msra.mxu0 0
      %329 = vmatprep.subr.bf16.mxu0 0
      %330 = vmatpush1.bf16.xpose.msra.mxu0 0
      %331 = vmatprep.subr.bf16.mxu0 0
      %332 = vmatpush1.bf16.xpose.msra.mxu0 0
      %333 = vmatprep.subr.bf16.mxu0 0
      %334 = vmatpush1.bf16.xpose.msra.mxu0 0
      %335 = vmatprep.subr.bf16.mxu0 0
      %336 = vmatpush1.bf16.xpose.msra.mxu0 0
      %337 = vmatprep.subr.bf16.mxu0 0
      %338 = vmatpush1.bf16.xpose.msra.mxu0 0
      %339 = vmatprep.mubr.bf16.mxu0 0
      %340 = vmatmul.mubr.bf16.gmra.mrb[0].mxu0 %v302
      %v341 = vpop.f32.mrb[0].mxu0
      %v342 = vadd.f32 0.0, %v341
      %v343 = vpop.f32.mrb[0].mxu0
      %v344 = vpop.f32.mrb[0].mxu0
      %v345 = vpop.f32.mrb[0].mxu0
      %346 = vdwg.mxu0
      %v347 = vmul.f32 %v342, 0.35355338
      %348 = vrot.lane.b32.xlu0 %v245, 104
      %v349 = vpop.permute.xlu0 %348
      %350 = vrot.lane.b32.xlu0 %v192, 72
      %v351 = vpop.permute.xlu0 %350
      %v353 = vsel %vm195, %v349, 0
      %v356 = vsel %vm195, %v351, 0
      %358 = vmatprep.subr.bf16.mxu0 0
      %359 = vmatpush1.bf16.xpose.msra.mxu0 %v356
      %360 = vmatprep.subr.bf16.mxu0 0
      %361 = vmatpush1.bf16.xpose.msra.mxu0 0
      %362 = vmatprep.subr.bf16.mxu0 0
      %363 = vmatpush1.bf16.xpose.msra.mxu0 0
      %364 = vmatprep.subr.bf16.mxu0 0
      %365 = vmatpush1.bf16.xpose.msra.mxu0 0
      %366 = vmatprep.subr.bf16.mxu0 0
      %367 = vmatpush1.bf16.xpose.msra.mxu0 0
      %368 = vmatprep.subr.bf16.mxu0 0
      %369 = vmatpush1.bf16.xpose.msra.mxu0 0
      %370 = vmatprep.subr.bf16.mxu0 0
      %371 = vmatpush1.bf16.xpose.msra.mxu0 0
      %372 = vmatprep.subr.bf16.mxu0 0
      %373 = vmatpush1.bf16.xpose.msra.mxu0 0
      %374 = vmatprep.subr.bf16.mxu0 0
      %375 = vmatpush1.bf16.xpose.msra.mxu0 0
      %376 = vmatprep.subr.bf16.mxu0 0
      %377 = vmatpush1.bf16.xpose.msra.mxu0 0
      %378 = vmatprep.subr.bf16.mxu0 0
      %379 = vmatpush1.bf16.xpose.msra.mxu0 0
      %380 = vmatprep.subr.bf16.mxu0 0
      %381 = vmatpush1.bf16.xpose.msra.mxu0 0
      %382 = vmatprep.subr.bf16.mxu0 0
      %383 = vmatpush1.bf16.xpose.msra.mxu0 0
      %384 = vmatprep.subr.bf16.mxu0 0
      %385 = vmatpush1.bf16.xpose.msra.mxu0 0
      %386 = vmatprep.subr.bf16.mxu0 0
      %387 = vmatpush1.bf16.xpose.msra.mxu0 0
      %388 = vmatprep.subr.bf16.mxu0 0
      %389 = vmatpush1.bf16.xpose.msra.mxu0 0
      %390 = vmatprep.mubr.bf16.mxu0 0
      %391 = vmatmul.mubr.bf16.gmra.mrb[0].mxu0 %v353
      %v392 = vpop.f32.mrb[0].mxu0
      %v393 = vadd.f32 0.0, %v392
      %v394 = vpop.f32.mrb[0].mxu0
      %v395 = vpop.f32.mrb[0].mxu0
      %v396 = vpop.f32.mrb[0].mxu0
      %397 = vdwg.mxu0
      %v398 = vmul.f32 %v393, 0.35355338
      %v399 = vmax.f32 %v242, %v296
      %v400 = vmax.f32 %v399, %v347
      %v401 = vmax.f32 %v400, %v398
      %v402 = vsub.f32 %v242, %v401
      %v403 = vmul.f32 %v402, 1.442695
      %v404 = vpow.pop %v403
      %v405 = vsub.f32 %v296, %v401
      %v406 = vmul.f32 %v405, 1.442695
      %v407 = vpow.pop %v406
      %v408 = vsub.f32 %v347, %v401
      %v409 = vmul.f32 %v408, 1.442695
      %v410 = vpow.pop %v409
      %v411 = vsub.f32 %v398, %v401
      %v412 = vmul.f32 %v411, 1.442695
      %v413 = vpow.pop %v412
      %v414 = vadd.f32 %v404, %v407
      %v415 = vadd.f32 %v414, %v410
      %v416 = vadd.f32 %v415, %v413
      %v417 = vrcp.pop %v416
      %v418 = vmul.f32 %v404, %v417
      %v419 = vpack.c.bf16 %v418, %v418
      %420 = vrot.lane.b32.xlu0 %v192, 64
      %v421 = vpop.permute.xlu0 %420
      %v423 = vsel %vm195, %v419, 0
      %vm425 = vcmask 1043456
      %v427 = vsel %vm425, %v421, 0
      %429 = vmatprep.subr.bf16.mxu0 0
      %430 = vmatpush1.bf16.msra.mxu0 %v427
      %431 = vmatprep.subr.bf16.mxu0 0
      %432 = vmatpush1.bf16.msra.mxu0 0
      %433 = vmatprep.subr.bf16.mxu0 0
      %434 = vmatpush1.bf16.msra.mxu0 0
      %435 = vmatprep.subr.bf16.mxu0 0
      %436 = vmatpush1.bf16.msra.mxu0 0
      %437 = vmatprep.subr.bf16.mxu0 0
      %438 = vmatpush1.bf16.msra.mxu0 0
      %439 = vmatprep.subr.bf16.mxu0 0
      %440 = vmatpush1.bf16.msra.mxu0 0
      %441 = vmatprep.subr.bf16.mxu0 0
      %442 = vmatpush1.bf16.msra.mxu0 0
      %443 = vmatprep.subr.bf16.mxu0 0
      %444 = vmatpush1.bf16.msra.mxu0 0
      %445 = vmatprep.subr.bf16.mxu0 0
      %446 = vmatpush1.bf16.msra.mxu0 0
      %447 = vmatprep.subr.bf16.mxu0 0
      %448 = vmatpush1.bf16.msra.mxu0 0
      %449 = vmatprep.subr.bf16.mxu0 0
      %450 = vmatpush1.bf16.msra.mxu0 0
      %451 = vmatprep.subr.bf16.mxu0 0
      %452 = vmatpush1.bf16.msra.mxu0 0
      %453 = vmatprep.subr.bf16.mxu0 0
      %454 = vmatpush1.bf16.msra.mxu0 0
      %455 = vmatprep.subr.bf16.mxu0 0
      %456 = vmatpush1.bf16.msra.mxu0 0
      %457 = vmatprep.subr.bf16.mxu0 0
      %458 = vmatpush1.bf16.msra.mxu0 0
      %459 = vmatprep.subr.bf16.mxu0 0
      %460 = vmatpush1.bf16.msra.mxu0 0
      %461 = vmatprep.mubr.bf16.mxu0 0
      %462 = vmatmul.mubr.bf16.gmra.mrb[0].mxu0 %v423
      %v463 = vpop.f32.mrb[0].mxu0
      %v464 = vadd.f32 0.0, %v463
      %v465 = vpop.f32.mrb[0].mxu0
      %v466 = vpop.f32.mrb[0].mxu0
      %v467 = vpop.f32.mrb[0].mxu0
      %468 = vdwg.mxu0
      %v469 = vmul.f32 %v407, %v417
      %v470 = vpack.c.bf16 %v469, %v469
      %471 = vrot.lane.b32.xlu0 %v192, 56
      %v472 = vpop.permute.xlu0 %471
      %v474 = vsel %vm195, %v470, 0
      %v477 = vsel %vm425, %v472, 0
      %479 = vmatprep.subr.bf16.mxu0 0
      %480 = vmatpush1.bf16.msra.mxu0 %v477
      %481 = vmatprep.subr.bf16.mxu0 0
      %482 = vmatpush1.bf16.msra.mxu0 0
      %483 = vmatprep.subr.bf16.mxu0 0
      %484 = vmatpush1.bf16.msra.mxu0 0
      %485 = vmatprep.subr.bf16.mxu0 0
      %486 = vmatpush1.bf16.msra.mxu0 0
      %487 = vmatprep.subr.bf16.mxu0 0
      %488 = vmatpush1.bf16.msra.mxu0 0
      %489 = vmatprep.subr.bf16.mxu0 0
      %490 = vmatpush1.bf16.msra.mxu0 0
      %491 = vmatprep.subr.bf16.mxu0 0
      %492 = vmatpush1.bf16.msra.mxu0 0
      %493 = vmatprep.subr.bf16.mxu0 0
      %494 = vmatpush1.bf16.msra.mxu0 0
      %495 = vmatprep.subr.bf16.mxu0 0
      %496 = vmatpush1.bf16.msra.mxu0 0
      %497 = vmatprep.subr.bf16.mxu0 0
      %498 = vmatpush1.bf16.msra.mxu0 0
      %499 = vmatprep.subr.bf16.mxu0 0
      %500 = vmatpush1.bf16.msra.mxu0 0
      %501 = vmatprep.subr.bf16.mxu0 0
      %502 = vmatpush1.bf16.msra.mxu0 0
      %503 = vmatprep.subr.bf16.mxu0 0
      %504 = vmatpush1.bf16.msra.mxu0 0
      %505 = vmatprep.subr.bf16.mxu0 0
      %506 = vmatpush1.bf16.msra.mxu0 0
      %507 = vmatprep.subr.bf16.mxu0 0
      %508 = vmatpush1.bf16.msra.mxu0 0
      %509 = vmatprep.subr.bf16.mxu0 0
      %510 = vmatpush1.bf16.msra.mxu0 0
      %511 = vmatprep.mubr.bf16.mxu0 0
      %512 = vmatmul.mubr.bf16.gmra.mrb[0].mxu0 %v474
      %v513 = vpop.f32.mrb[0].mxu0
      %v514 = vadd.f32 0.0, %v513
      %v515 = vpop.f32.mrb[0].mxu0
      %v516 = vpop.f32.mrb[0].mxu0
      %v517 = vpop.f32.mrb[0].mxu0
      %518 = vdwg.mxu0
      %v519 = vmul.f32 %v410, %v417
      %v520 = vpack.c.bf16 %v519, %v519
      %521 = vrot.lane.b32.xlu0 %v192, 48
      %v522 = vpop.permute.xlu0 %521
      %v524 = vsel %vm195, %v520, 0
      %v527 = vsel %vm425, %v522, 0
      %529 = vmatprep.subr.bf16.mxu0 0
      %530 = vmatpush1.bf16.msra.mxu0 %v527
      %531 = vmatprep.subr.bf16.mxu0 0
      %532 = vmatpush1.bf16.msra.mxu0 0
      %533 = vmatprep.subr.bf16.mxu0 0
      %534 = vmatpush1.bf16.msra.mxu0 0
      %535 = vmatprep.subr.bf16.mxu0 0
      %536 = vmatpush1.bf16.msra.mxu0 0
      %537 = vmatprep.subr.bf16.mxu0 0
      %538 = vmatpush1.bf16.msra.mxu0 0
      %539 = vmatprep.subr.bf16.mxu0 0
      %540 = vmatpush1.bf16.msra.mxu0 0
      %541 = vmatprep.subr.bf16.mxu0 0
      %542 = vmatpush1.bf16.msra.mxu0 0
      %543 = vmatprep.subr.bf16.mxu0 0
      %544 = vmatpush1.bf16.msra.mxu0 0
      %545 = vmatprep.subr.bf16.mxu0 0
      %546 = vmatpush1.bf16.msra.mxu0 0
      %547 = vmatprep.subr.bf16.mxu0 0
      %548 = vmatpush1.bf16.msra.mxu0 0
      %549 = vmatprep.subr.bf16.mxu0 0
      %550 = vmatpush1.bf16.msra.mxu0 0
      %551 = vmatprep.subr.bf16.mxu0 0
      %552 = vmatpush1.bf16.msra.mxu0 0
      %553 = vmatprep.subr.bf16.mxu0 0
      %554 = vmatpush1.bf16.msra.mxu0 0
      %555 = vmatprep.subr.bf16.mxu0 0
      %556 = vmatpush1.bf16.msra.mxu0 0
      %557 = vmatprep.subr.bf16.mxu0 0
      %558 = vmatpush1.bf16.msra.mxu0 0
      %559 = vmatprep.subr.bf16.mxu0 0
      %560 = vmatpush1.bf16.msra.mxu0 0
      %561 = vmatprep.mubr.bf16.mxu0 0
      %562 = vmatmul.mubr.bf16.gmra.mrb[0].mxu0 %v524
      %v563 = vpop.f32.mrb[0].mxu0
      %v564 = vadd.f32 0.0, %v563
      %v565 = vpop.f32.mrb[0].mxu0
      %v566 = vpop.f32.mrb[0].mxu0
      %v567 = vpop.f32.mrb[0].mxu0
      %568 = vdwg.mxu0
      %v569 = vmul.f32 %v413, %v417
      %v570 = vpack.c.bf16 %v569, %v569
      %571 = vrot.lane.b32.xlu0 %v192, 40
      %v572 = vpop.permute.xlu0 %571
      %v574 = vsel %vm195, %v570, 0
      %v577 = vsel %vm425, %v572, 0
      %579 = vmatprep.subr.bf16.mxu0 0
      %580 = vmatpush1.bf16.msra.mxu0 %v577
      %581 = vmatprep.subr.bf16.mxu0 0
      %582 = vmatpush1.bf16.msra.mxu0 0
      %583 = vmatprep.subr.bf16.mxu0 0
      %584 = vmatpush1.bf16.msra.mxu0 0
      %585 = vmatprep.subr.bf16.mxu0 0
      %586 = vmatpush1.bf16.msra.mxu0 0
      %587 = vmatprep.subr.bf16.mxu0 0
      %588 = vmatpush1.bf16.msra.mxu0 0
      %589 = vmatprep.subr.bf16.mxu0 0
      %590 = vmatpush1.bf16.msra.mxu0 0
      %591 = vmatprep.subr.bf16.mxu0 0
      %592 = vmatpush1.bf16.msra.mxu0 0
      %593 = vmatprep.subr.bf16.mxu0 0
      %594 = vmatpush1.bf16.msra.mxu0 0
      %595 = vmatprep.subr.bf16.mxu0 0
      %596 = vmatpush1.bf16.msra.mxu0 0
      %597 = vmatprep.subr.bf16.mxu0 0
      %598 = vmatpush1.bf16.msra.mxu0 0
      %599 = vmatprep.subr.bf16.mxu0 0
      %600 = vmatpush1.bf16.msra.mxu0 0
      %601 = vmatprep.subr.bf16.mxu0 0
      %602 = vmatpush1.bf16.msra.mxu0 0
      %603 = vmatprep.subr.bf16.mxu0 0
      %604 = vmatpush1.bf16.msra.mxu0 0
      %605 = vmatprep.subr.bf16.mxu0 0
      %606 = vmatpush1.bf16.msra.mxu0 0
      %607 = vmatprep.subr.bf16.mxu0 0
      %608 = vmatpush1.bf16.msra.mxu0 0
      %609 = vmatprep.subr.bf16.mxu0 0
      %610 = vmatpush1.bf16.msra.mxu0 0
      %611 = vmatprep.mubr.bf16.mxu0 0
      %612 = vmatmul.mubr.bf16.gmra.mrb[0].mxu0 %v574
      %v613 = vpop.f32.mrb[0].mxu0
      %v614 = vadd.f32 0.0, %v613
      %v615 = vpop.f32.mrb[0].mxu0
      %v616 = vpop.f32.mrb[0].mxu0
      %v617 = vpop.f32.mrb[0].mxu0
      %618 = vdwg.mxu0
      %620 = vrot.lane.b32.xlu0 %v514, 8
      %v621 = vpop.permute.xlu0 %620
      %624 = vrot.lane.b32.xlu0 %v564, 16
      %v625 = vpop.permute.xlu0 %624
      %628 = vrot.lane.b32.xlu0 %v614, 24
      %v629 = vpop.permute.xlu0 %628
      %v631 = vsel %vm195, %v464, %v621
      %vm632 = vcmask 130048
      %v633 = vsel %vm632, %v631, %v625
      %vm634 = vcmask 195584
      %v635 = vsel %vm634, %v633, %v629
      %v636 = vpack.c.bf16 %v635, %v635
      %vm637 = vcmask 257024
      %638 = vst.msk [vmem:[%s186] sm:$0xf] %vm637, %v636
      %p639 = scmp.lt.s32.totalorder %s17, 1
      %s640 = scalar_select %p639, %s17, 1
      %p641 = scmp.lt.s32.totalorder %s18, 0
      %s642 = scalar_select %p641, %s18, 0
      %s643 = sadd.s32 %s642, %s640
      %s644 = smul.addr %s643, 4
      %s645 = scalar_lea.vmem %s2, %s644
      // Predicated region
      $region29: #{block_forward.6} parent=27 // pred_check
        %p646 = pneg %p99
      $region30: #{block_forward.6} parent=27 // pred_check_branch
        %648 = sbr.rel (%p646) target = $region32
      $region31: #{block_forward.6} parent=27 // pred_region
        _
      $region32: #{block_forward.6} parent=27 // pred_fallthru
        _
    $region28: #{block_forward.6} parent=5 // pred_fallthru
      _
    %p649 = scmp.le.s32.totalorder 2, %s8
    // Predicated region
    $region33: #{block_forward.6} parent=5 // pred_check
      %p650 = pneg %p649
    $region34: #{block_forward.6} parent=5 // pred_check_branch
      %652 = sbr.rel (%p650) target = $region36
    $region35: #{block_forward.6} parent=5 // pred_region
      %s653 = ssub.s32 %s8, 2
      // Predicated region
      $region37: #{block_forward.6} parent=35 // pred_check
        %p654 = pneg %p105
      $region38: #{block_forward.6} parent=35 // pred_check_branch
        %656 = sbr.rel (%p654) target = $region40
      $region39: #{block_forward.6} parent=35 // pred_region
        %p657 = scmp.lt.s32.totalorder %s19, 1
        %s658 = scalar_select %p657, %s19, 1
        %p659 = scmp.lt.s32.totalorder %s20, 0
        %s660 = scalar_select %p659, %s20, 0
        %s661 = sadd.s32 %s660, %s658
        %s662 = smul.addr %s661, 4
        %s663 = scalar_lea.vmem %s2, %s662
      $region40: #{block_forward.6} parent=35 // pred_fallthru
        _
    $region36: #{block_forward.6} parent=5 // pred_fallthru
      _
  $region6: #{block_forward.6} parent=0 // loop_footer
    %s12 = sadd.s32 1, %s8
  $region7: #{block_forward.6} parent=0 // loop_footer_branch
    %7 = sbr.rel target = $region3
  $region8: #{block_forward.6} parent=0 // loop_exit
    _

// kernel: block_forward.9
$region0: #{block_forward.9}
  #allocation0 [shape = 'u32[]', space=smem, size = 0x4, offset = 0x4, fixed_abs, tag = 'smem constant byte address 0x4 - core index']
  #allocation1 [shape = 'u32[144,128]{1,0:T(1,128)}', space=vmem, size = 0x12000, scoped, tag = 'internal scratch']
  %s0 = inlined_call_operand.vmem [shape: bf16[16,128], index: 0, kind: input, shape index: {}]
  %s1 = inlined_call_operand.vmem [shape: bf16[128,32], index: 1, kind: input, shape index: {}]
  %s2 = inlined_call_operand.vmem [shape: f32[1,32], index: 2, kind: input, shape index: {}]
  %s3 = inlined_call_operand.vmem [shape: f32[16,32], index: 3, kind: input, shape index: {}]
  %s4 = inlined_call_operand.hbm [shape: f32[16,32], index: 4, kind: output, shape index: {}]
  %s5 = sld [smem:[#allocation0]]
  $region26: #{block_forward.9} parent=0
    _
  %s7 = ssub.s32 1, %s5
  %s8 = scalar_select 0, %s7, %s5
  $region1: #{block_forward.9} parent=0
    #allocation2 [shape = 'u8[8192]{0}', space=vmem, size = 0x2000, scoped, tag = 'output window, operand 0, single buffered']
    #allocation3 [shape = 's32[1]{0}', space=sflag, size = 0x4, scoped, tag = 'scoped memory for block_forward.9']
    %9 = vsyncpa [#allocation3], 0
    // Predicated region
    $region2: #{block_forward.9} parent=1 // pred_check
      _
    $region3: #{block_forward.9} parent=1 // pred_check_branch
      %11 = sbr.rel (0) target = $region5
    $region4: #{block_forward.9} parent=1 // pred_region
      _
    $region5: #{block_forward.9} parent=1 // pred_fallthru
      _
    // Predicated region
    $region6: #{block_forward.9} parent=1 // pred_check
      _
    $region7: #{block_forward.9} parent=1 // pred_check_branch
      %13 = sbr.rel (0) target = $region9
    $region8: #{block_forward.9} parent=1 // pred_region
      _
    $region9: #{block_forward.9} parent=1 // pred_fallthru
      _
    // Predicated region
    $region10: #{block_forward.9} parent=1 // pred_check
      _
    $region11: #{block_forward.9} parent=1 // pred_check_branch
      %15 = sbr.rel (0) target = $region13
    $region12: #{block_forward.9} parent=1 // pred_region
      _
    $region13: #{block_forward.9} parent=1 // pred_fallthru
      _
    // Predicated region
    $region14: #{block_forward.9} parent=1 // pred_check
      _
    $region15: #{block_forward.9} parent=1 // pred_check_branch
      %17 = sbr.rel (0) target = $region17
    $region16: #{block_forward.9} parent=1 // pred_region
      _
    $region17: #{block_forward.9} parent=1 // pred_fallthru
      _
    %v19 = vld [vmem:[%s0] sm:$0xf]
    %v20 = vld [vmem:[%s0 + $0x4] sm:$0xf]
    %v21 = vld [vmem:[%s1] sm:$0xf]
    %v22 = vld [vmem:[%s1 + $0x4] sm:$0xf]
    %v23 = vld [vmem:[%s1 + $0x8] sm:$0xf]
    %v24 = vld [vmem:[%s1 + $0xc] sm:$0xf]
    %v25 = vld [vmem:[%s1 + $0x10] sm:$0xf]
    %v26 = vld [vmem:[%s1 + $0x14] sm:$0xf]
    %v27 = vld [vmem:[%s1 + $0x18] sm:$0xf]
    %v28 = vld [vmem:[%s1 + $0x1c] sm:$0xf]
    %v29 = vld [vmem:[%s1 + $0x20] sm:$0xf]
    %v30 = vld [vmem:[%s1 + $0x24] sm:$0xf]
    %v31 = vld [vmem:[%s1 + $0x28] sm:$0xf]
    %v32 = vld [vmem:[%s1 + $0x2c] sm:$0xf]
    %v33 = vld [vmem:[%s1 + $0x30] sm:$0xf]
    %v34 = vld [vmem:[%s1 + $0x34] sm:$0xf]
    %v35 = vld [vmem:[%s1 + $0x38] sm:$0xf]
    %v36 = vld [vmem:[%s1 + $0x3c] sm:$0xf]
    %v37 = vld [vmem:[%s2] sm:$0x1]
    %v39 = vlaneseq
    %v40 = vshrl.u32 %v39, 7
    %v41 = vsub.s32 0, %v40
    %v42 = vrot.slane %v37, %v41
    %v46 = vunpack.c.l.b16 %v19
    %v47 = vunpack.c.l.b16 %v20
    %v48 = vpack.c.b16 %v47, %v46
    %v66 = vunpack.c.l.b16 %v21
    %v67 = vunpack.c.l.b16 %v22
    %v68 = vunpack.c.l.b16 %v23
    %v69 = vunpack.c.l.b16 %v24
    %v70 = vunpack.c.l.b16 %v25
    %v71 = vunpack.c.l.b16 %v26
    %v72 = vunpack.c.l.b16 %v27
    %v73 = vunpack.c.l.b16 %v28
    %v74 = vunpack.c.l.b16 %v29
    %v75 = vunpack.c.l.b16 %v30
    %v76 = vunpack.c.l.b16 %v31
    %v77 = vunpack.c.l.b16 %v32
    %v78 = vunpack.c.l.b16 %v33
    %v79 = vunpack.c.l.b16 %v34
    %v80 = vunpack.c.l.b16 %v35
    %v81 = vunpack.c.l.b16 %v36
    %v82 = vpack.c.b16 %v67, %v66
    %v83 = vpack.c.b16 %v69, %v68
    %v84 = vpack.c.b16 %v71, %v70
    %v85 = vpack.c.b16 %v73, %v72
    %v86 = vpack.c.b16 %v75, %v74
    %v87 = vpack.c.b16 %v77, %v76
    %v88 = vpack.c.b16 %v79, %v78
    %v89 = vpack.c.b16 %v81, %v80
    %98 = vmatprep.subr.bf16.mxu0 0
    %99 = vmatpush1.bf16.msra.mxu0 %v82
    %100 = vmatprep.subr.bf16.mxu0 0
    %101 = vmatpush1.bf16.msra.mxu0 %v83
    %102 = vmatprep.subr.bf16.mxu0 0
    %103 = vmatpush1.bf16.msra.mxu0 %v84
    %104 = vmatprep.subr.bf16.mxu0 0
    %105 = vmatpush1.bf16.msra.mxu0 %v85
    %106 = vmatprep.subr.bf16.mxu0 0
    %107 = vmatpush1.bf16.msra.mxu0 %v86
    %108 = vmatprep.subr.bf16.mxu0 0
    %109 = vmatpush1.bf16.msra.mxu0 %v87
    %110 = vmatprep.subr.bf16.mxu0 0
    %111 = vmatpush1.bf16.msra.mxu0 %v88
    %112 = vmatprep.subr.bf16.mxu0 0
    %113 = vmatpush1.bf16.msra.mxu0 %v89
    %114 = vmatprep.subr.bf16.mxu0 0
    %115 = vmatpush1.bf16.msra.mxu0 0
    %116 = vmatprep.subr.bf16.mxu0 0
    %117 = vmatpush1.bf16.msra.mxu0 0
    %118 = vmatprep.subr.bf16.mxu0 0
    %119 = vmatpush1.bf16.msra.mxu0 0
    %120 = vmatprep.subr.bf16.mxu0 0
    %121 = vmatpush1.bf16.msra.mxu0 0
    %122 = vmatprep.subr.bf16.mxu0 0
    %123 = vmatpush1.bf16.msra.mxu0 0
    %124 = vmatprep.subr.bf16.mxu0 0
    %125 = vmatpush1.bf16.msra.mxu0 0
    %126 = vmatprep.subr.bf16.mxu0 0
    %127 = vmatpush1.bf16.msra.mxu0 0
    %128 = vmatprep.subr.bf16.mxu0 0
    %129 = vmatpush1.bf16.msra.mxu0 0
    %130 = vmatprep.mubr.bf16.mxu0 0
    %131 = vmatmul.mubr.bf16.gmra.mrb[0].mxu0 %v48
    %v132 = vpop.f32.mrb[0].mxu0
    %v133 = vadd.f32 %v42, %v132
    %v134 = vpop.f32.mrb[0].mxu0
    %v135 = vpop.f32.mrb[0].mxu0
    %v136 = vadd.f32 %v42, %v135
    %v137 = vpop.f32.mrb[0].mxu0
    %138 = vdwg.mxu0
    %v139 = vld [vmem:[%s3] sm:$0xff]
    %v140 = vld [vmem:[%s3 + $0x8] sm:$0xff]
    %v141 = vadd.f32 %v133, %v139
    %v142 = vadd.f32 %v136, %v140
    %vm143 = vcmask 261120
    %144 = vst.msk [vmem:[#allocation2] sm:$0xff] %vm143, %v141
    %145 = vst.msk [vmem:[#allocation2 + $0x8] sm:$0xff] %vm143, %v142
    // Predicated region
    $region18: #{block_forward.9} parent=1 // pred_check
      _
    $region19: #{block_forward.9} parent=1 // pred_check_branch
      %147 = sbr.rel (0) target = $region21
    $region20: #{block_forward.9} parent=1 // pred_region
      %s149 = ssub.s32 256, 256
      %150 = vsyncadd [#allocation3], %s149
      %s151 = sshll.u32 [#allocation2], 4
      %s152 = int_to_ptr.vmem [resolvable:$true] %s151
      %157 = dma.vmem_to_hbm [thread:$0]  %s152, 256, %s4, [#allocation3], 128, 128, 8
    $region21: #{block_forward.9} parent=1 // pred_fallthru
      _
    // Predicated region
    $region22: #{block_forward.9} parent=1 // pred_check
      _
    $region23: #{block_forward.9} parent=1 // pred_check_branch
      %159 = sbr.rel (0) target = $region25
    $region24: #{block_forward.9} parent=1 // pred_region
      %160 = dma.done [#allocation3], 256
    $region25: #{block_forward.9} parent=1 // pred_fallthru
      _
    %161 = vsyncpa [#allocation3], 1

</llo_original>
